<compile_context>
chip_gen: v6e
topology: v6e:2x2x1
jax: 0.10.0
libtpu: 0.0.40
codegen_flags: <defaults>
</compile_context>

<pallas_src>
import math

import jax
import jax.numpy as jnp
import numpy as np
from jax.experimental import pallas as pl
from jax.experimental.pallas import tpu as pltpu


def satcn_kernel(x_ref, adj_ref, adjm_ref, degm_ref, deg_ref,
                 th0_ref, b0_ref, wt0_ref, bt0_ref,
                 th1_ref, b1_ref, wt1_ref, bt1_ref,
                 wout_ref, bout_ref, o_ref):
    x = x_ref[0]          # (N, T)   nodes on sublanes, all time steps fused
    adj = adj_ref[0]      # (N, N)   top-k filtered adjacency
    adjm = adjm_ref[0]    # (N, N)   top-k filtered mask adjacency
    degm = degm_ref[0]    # (N, 1)   row degrees of adjm (hoisted to wrapper)
    deg = deg_ref[0]      # (N, 1)   row degrees of adj  (hoisted to wrapper)

    N, T = x.shape
    C = wt0_ref.shape[0]
    th0 = th0_ref[...]    # (1, C)
    b0 = b0_ref[...]      # (1, C)

    # ---- STower 0: masked 'mean' aggregation + 'identity' scaler, all T ----
    m0 = jnp.dot(adjm, x, preferred_element_type=jnp.float32) / degm   # (N, T)
    m0 = jnp.where(jnp.isnan(m0), 6.0, m0)    # m[isnan] = 6
    m0 = jnp.where(jnp.isinf(m0), 0.0, m0)    # m[isinf] = 0
    m0 = jnp.where(m0 > 6.0, 6.0, m0)         # m[m > 6] = 6

    # Theta_po projection (in_features == 1): outer-product broadcast per time
    # step, assembled T-major into a single (T*N, C) activation slab so the
    # following 1x1 convs are one big MXU matmul each.
    rows = [m0[:, t:t + 1] * th0 for t in range(T)]      # T x (N, C)
    h = jnp.concatenate(rows, axis=0) + b0               # (T*N, C)

    # ---- tcn layer 0 ('linear' act): tanh(conv1x1(h) + h) ----
    h = jnp.tanh(jnp.dot(h, wt0_ref[...], preferred_element_type=jnp.float32)
                 + bt0_ref[...] + h)                     # (T*N, C)

    # ---- layer i=0: STower (no masking, 'mean') per time step (unrolled) ----
    rows = []
    for t in range(T):
        h_t = h[t * N:(t + 1) * N, :]                    # (N, C) static slice
        rows.append(jnp.dot(adj, h_t, preferred_element_type=jnp.float32) / deg)
    m1 = jnp.concatenate(rows, axis=0)                   # (T*N, C)

    h = jnp.dot(m1, th1_ref[...], preferred_element_type=jnp.float32) + b1_ref[...]
    h = jnp.maximum(h, 0.0)                              # relu
    h = jnp.tanh(jnp.dot(h, wt1_ref[...], preferred_element_type=jnp.float32)
                 + bt1_ref[...] + h)                     # tcn layer 1
    h = jnp.maximum(h, 0.0)                              # relu

    # ---- out_conv: 1x1 conv C -> 1, written lane-dense as (N, T) ----
    y_all = jnp.dot(h, wout_ref[...], preferred_element_type=jnp.float32) \
        + bout_ref[...]                                  # (T*N, 1)
    cols = [y_all[t * N:(t + 1) * N, :] for t in range(T)]
    o_ref[0] = jnp.concatenate(cols, axis=1)             # (N, T)


def topk_filter(a, k):
    # torch.topk(..., largest=True) kth value per row; zero everything below it.
    kth = jax.lax.top_k(a, k)[0][..., -1:]
    return jnp.where(a < kth, jnp.zeros_like(a), a)


def satcn_forward(X, adj, adj_mask, params, neighbor=2):
    """X: (B, T, N, in_variables); adj/adj_mask: (N, N) or (B, N, N)."""
    B, T, N, _ = X.shape
    C = params["theta1"].shape[0]

    # glue: X.unsqueeze(1)[:, :, :, :, 0] -> single variable, then transpose so
    # nodes sit on sublanes and the full time axis rides along lanes.
    x = jnp.swapaxes(X[..., 0].astype(jnp.float32), 1, 2)     # (B, N, T)

    adj = topk_filter(adj.astype(jnp.float32), neighbor)
    adj_mask = topk_filter(adj_mask.astype(jnp.float32), neighbor)

    # Shared (2-D) adjacency: keep a single (1, N, N) copy resident across the
    # whole grid instead of tiling/re-DMAing B copies.
    def adj_inputs(a):
        if a.ndim == 2:
            return a[None], (lambda b: (0, 0, 0))
        return a, (lambda b: (b, 0, 0))

    adj_b, adj_idx = adj_inputs(adj)
    adjm_b, adjm_idx = adj_inputs(adj_mask)

    # Degree vectors hoisted out of the kernel (depend only on the adjacency).
    degm = jnp.sum(adjm_b, axis=-1, keepdims=True)            # (Bm, N, 1)
    deg = jnp.sum(adj_b, axis=-1, keepdims=True)              # (Ba, N, 1)

    def rep(shape):  # replicated (un-tiled) parameter spec
        return pl.BlockSpec(shape, lambda b: (0,) * len(shape))

    # NOTE: grid=(B,) with "parallel" keeps both v7x TensorCores busy for B>=2.
    # TODO(synk): if B == 1 on v7x, split T (or N) into a 2-way parallel
    # leading grid axis; if N grows beyond ~1-2k, tile the (N, N) adjacency
    # blocks to respect the v7x 64 MiB VMEM budget.
    out = pl.pallas_call(
        satcn_kernel,
        out_shape=jax.ShapeDtypeStruct((B, N, T), jnp.float32),
        grid=(B,),
        in_specs=[
            pl.BlockSpec((1, N, T), lambda b: (b, 0, 0)),     # x
            pl.BlockSpec((1, N, N), adj_idx),                 # adj
            pl.BlockSpec((1, N, N), adjm_idx),                # adj_mask
            pl.BlockSpec((1, N, 1), adjm_idx),                # degm
            pl.BlockSpec((1, N, 1), adj_idx),                 # deg
            rep((1, C)), rep((1, C)),    # Theta_po / bias_po  (s_layer0)
            rep((C, C)), rep((1, C)),    # t_layer0 conv W^T / bias
            rep((C, C)), rep((1, C)),    # Theta_po / bias_po  (s_convs[0])
            rep((C, C)), rep((1, C)),    # t_convs[0] conv W^T / bias
            rep((C, 1)), rep((1, 1)),    # out_conv W^T / bias
        ],
        out_specs=pl.BlockSpec((1, N, T), lambda b: (b, 0, 0)),
        compiler_params=pltpu.CompilerParams(
            dimension_semantics=("parallel",)),
    )(x, adj_b, adjm_b, degm, deg,
      params["theta0"], params["bias0"], params["wt0"], params["bt0"],
      params["theta1"], params["bias1"], params["wt1"], params["bt1"],
      params["wout"], params["bout"])

    return jnp.swapaxes(out, 1, 2)   # (B, T, N), matches y.reshape(B, T, N)


def satcn_reference(X, adj, adj_mask, params, neighbor=2):
    """Pure-JAX reference (same math, highest precision) for validation."""
    B, T, N, _ = X.shape
    hp = jax.lax.Precision.HIGHEST
    x = X[..., 0][..., None].astype(jnp.float32)
    if adj.ndim == 2:
        adj = jnp.tile(adj[None], (B, 1, 1))
    if adj_mask.ndim == 2:
        adj_mask = jnp.tile(adj_mask[None], (B, 1, 1))
    adj = topk_filter(adj.astype(jnp.float32), neighbor)
    adj_mask = topk_filter(adj_mask.astype(jnp.float32), neighbor)

    degm = adj_mask.sum(-1, keepdims=True)                      # (B, N, 1)
    m0 = jnp.einsum('bij,btjc->btic', adj_mask, x, precision=hp) / degm[:, None]
    m0 = jnp.where(jnp.isnan(m0), 6.0, m0)
    m0 = jnp.where(jnp.isinf(m0), 0.0, m0)
    m0 = jnp.where(m0 > 6.0, 6.0, m0)
    h = jnp.einsum('btnc,co->btno', m0, params["theta0"], precision=hp) + params["bias0"][0]
    h = jnp.tanh(jnp.einsum('btnc,co->btno', h, params["wt0"], precision=hp)
                 + params["bt0"][0] + h)
    deg = adj.sum(-1, keepdims=True)
    m1 = jnp.einsum('bij,btjc->btic', adj, h, precision=hp) / deg[:, None]
    h = jnp.einsum('btnc,co->btno', m1, params["theta1"], precision=hp) + params["bias1"][0]
    h = jnp.maximum(h, 0.0)
    h = jnp.tanh(jnp.einsum('btnc,co->btno', h, params["wt1"], precision=hp)
                 + params["bt1"][0] + h)
    h = jnp.maximum(h, 0.0)
    y = jnp.einsum('btnc,co->btno', h, params["wout"], precision=hp) + params["bout"][0]
    return y[..., 0]


if __name__ == "__main__":
    B, T, N = 2, 8, 16
    C = 32            # channels
    in_variables = 1
    neighbor = 2

    key = jax.random.PRNGKey(0)
    ks = jax.random.split(key, 16)
    stdv = 1.0 / math.sqrt(C)

    def u(k, shape, s):
        return jax.random.uniform(k, shape, jnp.float32, minval=-s, maxval=s)

    params = dict(
        theta0=u(ks[0], (in_variables, C), stdv),   # STower0 Theta_po (1*1*1, C)
        bias0=u(ks[1], (1, C), stdv),               # STower0 bias_po
        wt0=u(ks[2], (C, C), stdv),                 # t_layer0 conv weight (C_in, C_out)
        bt0=u(ks[3], (1, C), stdv),
        theta1=u(ks[4], (C, C), stdv),              # s_convs[0] Theta_po (1*1*C, C)
        bias1=u(ks[5], (1, C), stdv),
        wt1=u(ks[6], (C, C), stdv),                 # t_convs[0] conv weight
        bt1=u(ks[7], (1, C), stdv),
        wout=u(ks[8], (C, in_variables), stdv),     # out_conv weight (C_in, C_out)
        bout=u(ks[9], (1, in_variables), stdv),
    )

    X = jax.random.normal(ks[10], (B, T, N, in_variables), jnp.float32)
    adj = jax.random.uniform(ks[11], (N, N), jnp.float32)
    adj_mask = jax.random.uniform(ks[12], (N, N), jnp.float32)

    out = satcn_forward(X, adj, adj_mask, params, neighbor=neighbor)
    out = jax.block_until_ready(out)
    assert out.shape == (B, T, N)

    ref = satcn_reference(X, adj, adj_mask, params, neighbor=neighbor)
    np.testing.assert_allclose(np.asarray(out), np.asarray(ref),
                               rtol=1e-3, atol=1e-3)
    print("KERNEL_OK")
</pallas_src>

<mosaic_0001>
module attributes {stable_mosaic.version = 11 : i64} {
  func.func @satcn_kernel(%arg0: i32, %arg1: memref<1x16x8xf32, #tpu.memory_space<vmem>>, %arg2: memref<1x16x16xf32, #tpu.memory_space<vmem>>, %arg3: memref<1x16x16xf32, #tpu.memory_space<vmem>>, %arg4: memref<1x16x1xf32, #tpu.memory_space<vmem>>, %arg5: memref<1x16x1xf32, #tpu.memory_space<vmem>>, %arg6: memref<1x32xf32, #tpu.memory_space<vmem>>, %arg7: memref<1x32xf32, #tpu.memory_space<vmem>>, %arg8: memref<32x32xf32, #tpu.memory_space<vmem>>, %arg9: memref<1x32xf32, #tpu.memory_space<vmem>>, %arg10: memref<32x32xf32, #tpu.memory_space<vmem>>, %arg11: memref<1x32xf32, #tpu.memory_space<vmem>>, %arg12: memref<32x32xf32, #tpu.memory_space<vmem>>, %arg13: memref<1x32xf32, #tpu.memory_space<vmem>>, %arg14: memref<32x1xf32, #tpu.memory_space<vmem>>, %arg15: memref<1x1xf32, #tpu.memory_space<vmem>>, %arg16: memref<1x16x8xf32, #tpu.memory_space<vmem>>) attributes {dimension_semantics = [#tpu.dimension_semantics<parallel>], iteration_bounds = array<i64: 2>, scalar_prefetch = 0 : i64, scratch_operands = 0 : i64, tpu.core_type = #tpu.core_type<tc>, window_params = [{transform_indices = @transform_0, window_bounds = array<i64: 1, 16, 8>}, {pipeline_mode = #tpu.pipeline_mode<synchronous>, transform_indices = @transform_1, window_bounds = array<i64: 1, 16, 16>}, {pipeline_mode = #tpu.pipeline_mode<synchronous>, transform_indices = @transform_2, window_bounds = array<i64: 1, 16, 16>}, {pipeline_mode = #tpu.pipeline_mode<synchronous>, transform_indices = @transform_3, window_bounds = array<i64: 1, 16, 1>}, {pipeline_mode = #tpu.pipeline_mode<synchronous>, transform_indices = @transform_4, window_bounds = array<i64: 1, 16, 1>}, {pipeline_mode = #tpu.pipeline_mode<synchronous>, transform_indices = @transform_5, window_bounds = array<i64: 1, 32>}, {pipeline_mode = #tpu.pipeline_mode<synchronous>, transform_indices = @transform_6, window_bounds = array<i64: 1, 32>}, {pipeline_mode = #tpu.pipeline_mode<synchronous>, transform_indices = @transform_7, window_bounds = array<i64: 32, 32>}, {pipeline_mode = #tpu.pipeline_mode<synchronous>, transform_indices = @transform_8, window_bounds = array<i64: 1, 32>}, {pipeline_mode = #tpu.pipeline_mode<synchronous>, transform_indices = @transform_9, window_bounds = array<i64: 32, 32>}, {pipeline_mode = #tpu.pipeline_mode<synchronous>, transform_indices = @transform_10, window_bounds = array<i64: 1, 32>}, {pipeline_mode = #tpu.pipeline_mode<synchronous>, transform_indices = @transform_11, window_bounds = array<i64: 32, 32>}, {pipeline_mode = #tpu.pipeline_mode<synchronous>, transform_indices = @transform_12, window_bounds = array<i64: 1, 32>}, {pipeline_mode = #tpu.pipeline_mode<synchronous>, transform_indices = @transform_13, window_bounds = array<i64: 32, 1>}, {pipeline_mode = #tpu.pipeline_mode<synchronous>, transform_indices = @transform_14, window_bounds = array<i64: 1, 1>}, {transform_indices = @transform_15, window_bounds = array<i64: 1, 16, 8>}]} {
    %c0 = arith.constant 0 : index
    %c0_0 = arith.constant 0 : index
    %c0_1 = arith.constant 0 : index
    %0 = vector.load %arg1[%c0, %c0_0, %c0_1] : memref<1x16x8xf32, #tpu.memory_space<vmem>>, vector<1x16x8xf32>
    %1 = vector.shape_cast %0 : vector<1x16x8xf32> to vector<16x8xf32>
    %c0_2 = arith.constant 0 : index
    %c0_3 = arith.constant 0 : index
    %c0_4 = arith.constant 0 : index
    %2 = vector.load %arg2[%c0_2, %c0_3, %c0_4] : memref<1x16x16xf32, #tpu.memory_space<vmem>>, vector<1x16x16xf32>
    %3 = vector.shape_cast %2 : vector<1x16x16xf32> to vector<16x16xf32>
    %c0_5 = arith.constant 0 : index
    %c0_6 = arith.constant 0 : index
    %c0_7 = arith.constant 0 : index
    %4 = vector.load %arg3[%c0_5, %c0_6, %c0_7] : memref<1x16x16xf32, #tpu.memory_space<vmem>>, vector<1x16x16xf32>
    %5 = vector.shape_cast %4 : vector<1x16x16xf32> to vector<16x16xf32>
    %c0_8 = arith.constant 0 : index
    %c0_9 = arith.constant 0 : index
    %c0_10 = arith.constant 0 : index
    %6 = vector.load %arg4[%c0_8, %c0_9, %c0_10] : memref<1x16x1xf32, #tpu.memory_space<vmem>>, vector<1x16x1xf32>
    %7 = vector.shape_cast %6 : vector<1x16x1xf32> to vector<16x1xf32>
    %c0_11 = arith.constant 0 : index
    %c0_12 = arith.constant 0 : index
    %c0_13 = arith.constant 0 : index
    %8 = vector.load %arg5[%c0_11, %c0_12, %c0_13] : memref<1x16x1xf32, #tpu.memory_space<vmem>>, vector<1x16x1xf32>
    %9 = vector.shape_cast %8 : vector<1x16x1xf32> to vector<16x1xf32>
    %c0_14 = arith.constant 0 : index
    %c0_15 = arith.constant 0 : index
    %10 = vector.load %arg6[%c0_14, %c0_15] : memref<1x32xf32, #tpu.memory_space<vmem>>, vector<1x32xf32>
    %c0_16 = arith.constant 0 : index
    %c0_17 = arith.constant 0 : index
    %11 = vector.load %arg7[%c0_16, %c0_17] : memref<1x32xf32, #tpu.memory_space<vmem>>, vector<1x32xf32>
    %cst = arith.constant dense<0.000000e+00> : vector<16x8xf32>
    %12 = tpu.matmul %5, %1, %cst {dimension_numbers = #tpu.dot_dimension_numbers<[1], [0], [0], [1], [0, 0, 1, 1], [], []>} : vector<16x16xf32>, vector<16x8xf32>, vector<16x8xf32> -> vector<16x8xf32>
    %13 = vector.broadcast %7 : vector<16x1xf32> to vector<16x8xf32>
    %14 = arith.divf %12, %13 : vector<16x8xf32>
    %15 = arith.cmpf one, %14, %14 : vector<16x8xf32>
    %cst_18 = arith.constant 6.000000e+00 : f32
    %16 = vector.broadcast %cst_18 : f32 to vector<16x8xf32>
    %17 = arith.select %15, %16, %14 : vector<16x8xi1>, vector<16x8xf32>
    %18 = math.absf %17 : vector<16x8xf32>
    %cst_19 = arith.constant 0x7F800000 : f32
    %19 = vector.broadcast %cst_19 : f32 to vector<16x8xf32>
    %20 = arith.cmpf oeq, %18, %19 : vector<16x8xf32>
    %cst_20 = arith.constant 0.000000e+00 : f32
    %21 = vector.broadcast %cst_20 : f32 to vector<16x8xf32>
    %22 = arith.select %20, %21, %17 : vector<16x8xi1>, vector<16x8xf32>
    %cst_21 = arith.constant 6.000000e+00 : f32
    %23 = vector.broadcast %cst_21 : f32 to vector<16x8xf32>
    %24 = arith.cmpf ogt, %22, %23 : vector<16x8xf32>
    %cst_22 = arith.constant 6.000000e+00 : f32
    %25 = vector.broadcast %cst_22 : f32 to vector<16x8xf32>
    %26 = arith.select %24, %25, %22 : vector<16x8xi1>, vector<16x8xf32>
    %27 = vector.extract_strided_slice %26 {offsets = [0, 0], sizes = [16, 1], strides = [1, 1]} : vector<16x8xf32> to vector<16x1xf32>
    %28 = vector.broadcast %27 : vector<16x1xf32> to vector<16x32xf32>
    %29 = vector.broadcast %10 : vector<1x32xf32> to vector<16x32xf32>
    %30 = arith.mulf %28, %29 : vector<16x32xf32>
    %31 = vector.extract_strided_slice %26 {offsets = [0, 1], sizes = [16, 1], strides = [1, 1]} : vector<16x8xf32> to vector<16x1xf32>
    %32 = vector.broadcast %31 : vector<16x1xf32> to vector<16x32xf32>
    %33 = vector.broadcast %10 : vector<1x32xf32> to vector<16x32xf32>
    %34 = arith.mulf %32, %33 : vector<16x32xf32>
    %35 = vector.extract_strided_slice %26 {offsets = [0, 2], sizes = [16, 1], strides = [1, 1]} : vector<16x8xf32> to vector<16x1xf32>
    %36 = vector.broadcast %35 : vector<16x1xf32> to vector<16x32xf32>
    %37 = vector.broadcast %10 : vector<1x32xf32> to vector<16x32xf32>
    %38 = arith.mulf %36, %37 : vector<16x32xf32>
    %39 = vector.extract_strided_slice %26 {offsets = [0, 3], sizes = [16, 1], strides = [1, 1]} : vector<16x8xf32> to vector<16x1xf32>
    %40 = vector.broadcast %39 : vector<16x1xf32> to vector<16x32xf32>
    %41 = vector.broadcast %10 : vector<1x32xf32> to vector<16x32xf32>
    %42 = arith.mulf %40, %41 : vector<16x32xf32>
    %43 = vector.extract_strided_slice %26 {offsets = [0, 4], sizes = [16, 1], strides = [1, 1]} : vector<16x8xf32> to vector<16x1xf32>
    %44 = vector.broadcast %43 : vector<16x1xf32> to vector<16x32xf32>
    %45 = vector.broadcast %10 : vector<1x32xf32> to vector<16x32xf32>
    %46 = arith.mulf %44, %45 : vector<16x32xf32>
    %47 = vector.extract_strided_slice %26 {offsets = [0, 5], sizes = [16, 1], strides = [1, 1]} : vector<16x8xf32> to vector<16x1xf32>
    %48 = vector.broadcast %47 : vector<16x1xf32> to vector<16x32xf32>
    %49 = vector.broadcast %10 : vector<1x32xf32> to vector<16x32xf32>
    %50 = arith.mulf %48, %49 : vector<16x32xf32>
    %51 = vector.extract_strided_slice %26 {offsets = [0, 6], sizes = [16, 1], strides = [1, 1]} : vector<16x8xf32> to vector<16x1xf32>
    %52 = vector.broadcast %51 : vector<16x1xf32> to vector<16x32xf32>
    %53 = vector.broadcast %10 : vector<1x32xf32> to vector<16x32xf32>
    %54 = arith.mulf %52, %53 : vector<16x32xf32>
    %55 = vector.extract_strided_slice %26 {offsets = [0, 7], sizes = [16, 1], strides = [1, 1]} : vector<16x8xf32> to vector<16x1xf32>
    %56 = vector.broadcast %55 : vector<16x1xf32> to vector<16x32xf32>
    %57 = vector.broadcast %10 : vector<1x32xf32> to vector<16x32xf32>
    %58 = arith.mulf %56, %57 : vector<16x32xf32>
    %59 = tpu.concatenate %30, %34, %38, %42, %46, %50, %54, %58 in 0 : vector<16x32xf32>, vector<16x32xf32>, vector<16x32xf32>, vector<16x32xf32>, vector<16x32xf32>, vector<16x32xf32>, vector<16x32xf32>, vector<16x32xf32> -> vector<128x32xf32>
    %60 = vector.broadcast %11 : vector<1x32xf32> to vector<128x32xf32>
    %61 = arith.addf %59, %60 : vector<128x32xf32>
    %c0_23 = arith.constant 0 : index
    %c0_24 = arith.constant 0 : index
    %62 = vector.load %arg8[%c0_23, %c0_24] : memref<32x32xf32, #tpu.memory_space<vmem>>, vector<32x32xf32>
    %cst_25 = arith.constant dense<0.000000e+00> : vector<128x32xf32>
    %63 = tpu.matmul %61, %62, %cst_25 {dimension_numbers = #tpu.dot_dimension_numbers<[1], [0], [0], [1], [0, 0, 1, 1], [], []>} : vector<128x32xf32>, vector<32x32xf32>, vector<128x32xf32> -> vector<128x32xf32>
    %c0_26 = arith.constant 0 : index
    %c0_27 = arith.constant 0 : index
    %64 = vector.load %arg9[%c0_26, %c0_27] : memref<1x32xf32, #tpu.memory_space<vmem>>, vector<1x32xf32>
    %65 = vector.broadcast %64 : vector<1x32xf32> to vector<128x32xf32>
    %66 = arith.addf %63, %65 : vector<128x32xf32>
    %67 = arith.addf %66, %61 : vector<128x32xf32>
    %68 = math.tanh %67 : vector<128x32xf32>
    %69 = vector.extract_strided_slice %68 {offsets = [0, 0], sizes = [16, 32], strides = [1, 1]} : vector<128x32xf32> to vector<16x32xf32>
    %cst_28 = arith.constant dense<0.000000e+00> : vector<16x32xf32>
    %70 = tpu.matmul %3, %69, %cst_28 {dimension_numbers = #tpu.dot_dimension_numbers<[1], [0], [0], [1], [0, 0, 1, 1], [], []>} : vector<16x16xf32>, vector<16x32xf32>, vector<16x32xf32> -> vector<16x32xf32>
    %71 = vector.broadcast %9 : vector<16x1xf32> to vector<16x32xf32>
    %72 = arith.divf %70, %71 : vector<16x32xf32>
    %73 = vector.extract_strided_slice %68 {offsets = [16, 0], sizes = [16, 32], strides = [1, 1]} : vector<128x32xf32> to vector<16x32xf32>
    %cst_29 = arith.constant dense<0.000000e+00> : vector<16x32xf32>
    %74 = tpu.matmul %3, %73, %cst_29 {dimension_numbers = #tpu.dot_dimension_numbers<[1], [0], [0], [1], [0, 0, 1, 1], [], []>} : vector<16x16xf32>, vector<16x32xf32>, vector<16x32xf32> -> vector<16x32xf32>
    %75 = vector.broadcast %9 : vector<16x1xf32> to vector<16x32xf32>
    %76 = arith.divf %74, %75 : vector<16x32xf32>
    %77 = vector.extract_strided_slice %68 {offsets = [32, 0], sizes = [16, 32], strides = [1, 1]} : vector<128x32xf32> to vector<16x32xf32>
    %cst_30 = arith.constant dense<0.000000e+00> : vector<16x32xf32>
    %78 = tpu.matmul %3, %77, %cst_30 {dimension_numbers = #tpu.dot_dimension_numbers<[1], [0], [0], [1], [0, 0, 1, 1], [], []>} : vector<16x16xf32>, vector<16x32xf32>, vector<16x32xf32> -> vector<16x32xf32>
    %79 = vector.broadcast %9 : vector<16x1xf32> to vector<16x32xf32>
    %80 = arith.divf %78, %79 : vector<16x32xf32>
    %81 = vector.extract_strided_slice %68 {offsets = [48, 0], sizes = [16, 32], strides = [1, 1]} : vector<128x32xf32> to vector<16x32xf32>
    %cst_31 = arith.constant dense<0.000000e+00> : vector<16x32xf32>
    %82 = tpu.matmul %3, %81, %cst_31 {dimension_numbers = #tpu.dot_dimension_numbers<[1], [0], [0], [1], [0, 0, 1, 1], [], []>} : vector<16x16xf32>, vector<16x32xf32>, vector<16x32xf32> -> vector<16x32xf32>
    %83 = vector.broadcast %9 : vector<16x1xf32> to vector<16x32xf32>
    %84 = arith.divf %82, %83 : vector<16x32xf32>
    %85 = vector.extract_strided_slice %68 {offsets = [64, 0], sizes = [16, 32], strides = [1, 1]} : vector<128x32xf32> to vector<16x32xf32>
    %cst_32 = arith.constant dense<0.000000e+00> : vector<16x32xf32>
    %86 = tpu.matmul %3, %85, %cst_32 {dimension_numbers = #tpu.dot_dimension_numbers<[1], [0], [0], [1], [0, 0, 1, 1], [], []>} : vector<16x16xf32>, vector<16x32xf32>, vector<16x32xf32> -> vector<16x32xf32>
    %87 = vector.broadcast %9 : vector<16x1xf32> to vector<16x32xf32>
    %88 = arith.divf %86, %87 : vector<16x32xf32>
    %89 = vector.extract_strided_slice %68 {offsets = [80, 0], sizes = [16, 32], strides = [1, 1]} : vector<128x32xf32> to vector<16x32xf32>
    %cst_33 = arith.constant dense<0.000000e+00> : vector<16x32xf32>
    %90 = tpu.matmul %3, %89, %cst_33 {dimension_numbers = #tpu.dot_dimension_numbers<[1], [0], [0], [1], [0, 0, 1, 1], [], []>} : vector<16x16xf32>, vector<16x32xf32>, vector<16x32xf32> -> vector<16x32xf32>
    %91 = vector.broadcast %9 : vector<16x1xf32> to vector<16x32xf32>
    %92 = arith.divf %90, %91 : vector<16x32xf32>
    %93 = vector.extract_strided_slice %68 {offsets = [96, 0], sizes = [16, 32], strides = [1, 1]} : vector<128x32xf32> to vector<16x32xf32>
    %cst_34 = arith.constant dense<0.000000e+00> : vector<16x32xf32>
    %94 = tpu.matmul %3, %93, %cst_34 {dimension_numbers = #tpu.dot_dimension_numbers<[1], [0], [0], [1], [0, 0, 1, 1], [], []>} : vector<16x16xf32>, vector<16x32xf32>, vector<16x32xf32> -> vector<16x32xf32>
    %95 = vector.broadcast %9 : vector<16x1xf32> to vector<16x32xf32>
    %96 = arith.divf %94, %95 : vector<16x32xf32>
    %97 = vector.extract_strided_slice %68 {offsets = [112, 0], sizes = [16, 32], strides = [1, 1]} : vector<128x32xf32> to vector<16x32xf32>
    %cst_35 = arith.constant dense<0.000000e+00> : vector<16x32xf32>
    %98 = tpu.matmul %3, %97, %cst_35 {dimension_numbers = #tpu.dot_dimension_numbers<[1], [0], [0], [1], [0, 0, 1, 1], [], []>} : vector<16x16xf32>, vector<16x32xf32>, vector<16x32xf32> -> vector<16x32xf32>
    %99 = vector.broadcast %9 : vector<16x1xf32> to vector<16x32xf32>
    %100 = arith.divf %98, %99 : vector<16x32xf32>
    %101 = tpu.concatenate %72, %76, %80, %84, %88, %92, %96, %100 in 0 : vector<16x32xf32>, vector<16x32xf32>, vector<16x32xf32>, vector<16x32xf32>, vector<16x32xf32>, vector<16x32xf32>, vector<16x32xf32>, vector<16x32xf32> -> vector<128x32xf32>
    %c0_36 = arith.constant 0 : index
    %c0_37 = arith.constant 0 : index
    %102 = vector.load %arg10[%c0_36, %c0_37] : memref<32x32xf32, #tpu.memory_space<vmem>>, vector<32x32xf32>
    %cst_38 = arith.constant dense<0.000000e+00> : vector<128x32xf32>
    %103 = tpu.matmul %101, %102, %cst_38 {dimension_numbers = #tpu.dot_dimension_numbers<[1], [0], [0], [1], [0, 0, 1, 1], [], []>} : vector<128x32xf32>, vector<32x32xf32>, vector<128x32xf32> -> vector<128x32xf32>
    %c0_39 = arith.constant 0 : index
    %c0_40 = arith.constant 0 : index
    %104 = vector.load %arg11[%c0_39, %c0_40] : memref<1x32xf32, #tpu.memory_space<vmem>>, vector<1x32xf32>
    %105 = vector.broadcast %104 : vector<1x32xf32> to vector<128x32xf32>
    %106 = arith.addf %103, %105 : vector<128x32xf32>
    %cst_41 = arith.constant 0.000000e+00 : f32
    %107 = vector.broadcast %cst_41 : f32 to vector<128x32xf32>
    %108 = arith.maximumf %106, %107 : vector<128x32xf32>
    %c0_42 = arith.constant 0 : index
    %c0_43 = arith.constant 0 : index
    %109 = vector.load %arg12[%c0_42, %c0_43] : memref<32x32xf32, #tpu.memory_space<vmem>>, vector<32x32xf32>
    %cst_44 = arith.constant dense<0.000000e+00> : vector<128x32xf32>
    %110 = tpu.matmul %108, %109, %cst_44 {dimension_numbers = #tpu.dot_dimension_numbers<[1], [0], [0], [1], [0, 0, 1, 1], [], []>} : vector<128x32xf32>, vector<32x32xf32>, vector<128x32xf32> -> vector<128x32xf32>
    %c0_45 = arith.constant 0 : index
    %c0_46 = arith.constant 0 : index
    %111 = vector.load %arg13[%c0_45, %c0_46] : memref<1x32xf32, #tpu.memory_space<vmem>>, vector<1x32xf32>
    %112 = vector.broadcast %111 : vector<1x32xf32> to vector<128x32xf32>
    %113 = arith.addf %110, %112 : vector<128x32xf32>
    %114 = arith.addf %113, %108 : vector<128x32xf32>
    %115 = math.tanh %114 : vector<128x32xf32>
    %cst_47 = arith.constant 0.000000e+00 : f32
    %116 = vector.broadcast %cst_47 : f32 to vector<128x32xf32>
    %117 = arith.maximumf %115, %116 : vector<128x32xf32>
    %c0_48 = arith.constant 0 : index
    %c0_49 = arith.constant 0 : index
    %118 = vector.load %arg14[%c0_48, %c0_49] : memref<32x1xf32, #tpu.memory_space<vmem>>, vector<32x1xf32>
    %cst_50 = arith.constant dense<0.000000e+00> : vector<128x1xf32>
    %119 = tpu.matmul %117, %118, %cst_50 {dimension_numbers = #tpu.dot_dimension_numbers<[1], [0], [0], [1], [0, 0, 1, 1], [], []>} : vector<128x32xf32>, vector<32x1xf32>, vector<128x1xf32> -> vector<128x1xf32>
    %c0_51 = arith.constant 0 : index
    %c0_52 = arith.constant 0 : index
    %120 = vector.load %arg15[%c0_51, %c0_52] : memref<1x1xf32, #tpu.memory_space<vmem>>, vector<1x1xf32>
    %121 = vector.broadcast %120 : vector<1x1xf32> to vector<128x1xf32>
    %122 = arith.addf %119, %121 : vector<128x1xf32>
    %123 = vector.extract_strided_slice %122 {offsets = [0, 0], sizes = [16, 1], strides = [1, 1]} : vector<128x1xf32> to vector<16x1xf32>
    %124 = vector.extract_strided_slice %122 {offsets = [16, 0], sizes = [16, 1], strides = [1, 1]} : vector<128x1xf32> to vector<16x1xf32>
    %125 = vector.extract_strided_slice %122 {offsets = [32, 0], sizes = [16, 1], strides = [1, 1]} : vector<128x1xf32> to vector<16x1xf32>
    %126 = vector.extract_strided_slice %122 {offsets = [48, 0], sizes = [16, 1], strides = [1, 1]} : vector<128x1xf32> to vector<16x1xf32>
    %127 = vector.extract_strided_slice %122 {offsets = [64, 0], sizes = [16, 1], strides = [1, 1]} : vector<128x1xf32> to vector<16x1xf32>
    %128 = vector.extract_strided_slice %122 {offsets = [80, 0], sizes = [16, 1], strides = [1, 1]} : vector<128x1xf32> to vector<16x1xf32>
    %129 = vector.extract_strided_slice %122 {offsets = [96, 0], sizes = [16, 1], strides = [1, 1]} : vector<128x1xf32> to vector<16x1xf32>
    %130 = vector.extract_strided_slice %122 {offsets = [112, 0], sizes = [16, 1], strides = [1, 1]} : vector<128x1xf32> to vector<16x1xf32>
    %131 = tpu.concatenate %123, %124, %125, %126, %127, %128, %129, %130 in 1 : vector<16x1xf32>, vector<16x1xf32>, vector<16x1xf32>, vector<16x1xf32>, vector<16x1xf32>, vector<16x1xf32>, vector<16x1xf32>, vector<16x1xf32> -> vector<16x8xf32>
    %c0_53 = arith.constant 0 : index
    %c0_54 = arith.constant 0 : index
    %c0_55 = arith.constant 0 : index
    %132 = vector.load %arg16[%c0_53, %c0_54, %c0_55] : memref<1x16x8xf32, #tpu.memory_space<vmem>>, vector<1x16x8xf32>
    %133 = vector.shape_cast %132 : vector<1x16x8xf32> to vector<16x8xf32>
    %134 = vector.shape_cast %131 : vector<16x8xf32> to vector<1x16x8xf32>
    tpu.vector_store %arg16[%c0_53, %c0_54, %c0_55], %134 {strides = array<i32>} : memref<1x16x8xf32, #tpu.memory_space<vmem>>, vector<1x16x8xf32>,
    return
  }
  func.func @transform_0(%arg0: i32) -> (i32, i32, i32) {
    %c0_i32 = arith.constant 0 : i32
    %c0_i32_0 = arith.constant 0 : i32
    %c0_i32_1 = arith.constant 0 : i32
    return %arg0, %c0_i32, %c0_i32_0 : i32, i32, i32
  }
  func.func @transform_1(%arg0: i32) -> (i32, i32, i32) {
    %c0_i32 = arith.constant 0 : i32
    %c0_i32_0 = arith.constant 0 : i32
    %c0_i32_1 = arith.constant 0 : i32
    %c0_i32_2 = arith.constant 0 : i32
    return %c0_i32, %c0_i32_0, %c0_i32_1 : i32, i32, i32
  }
  func.func @transform_2(%arg0: i32) -> (i32, i32, i32) {
    %c0_i32 = arith.constant 0 : i32
    %c0_i32_0 = arith.constant 0 : i32
    %c0_i32_1 = arith.constant 0 : i32
    %c0_i32_2 = arith.constant 0 : i32
    return %c0_i32, %c0_i32_0, %c0_i32_1 : i32, i32, i32
  }
  func.func @transform_3(%arg0: i32) -> (i32, i32, i32) {
    %c0_i32 = arith.constant 0 : i32
    %c0_i32_0 = arith.constant 0 : i32
    %c0_i32_1 = arith.constant 0 : i32
    %c0_i32_2 = arith.constant 0 : i32
    return %c0_i32, %c0_i32_0, %c0_i32_1 : i32, i32, i32
  }
  func.func @transform_4(%arg0: i32) -> (i32, i32, i32) {
    %c0_i32 = arith.constant 0 : i32
    %c0_i32_0 = arith.constant 0 : i32
    %c0_i32_1 = arith.constant 0 : i32
    %c0_i32_2 = arith.constant 0 : i32
    return %c0_i32, %c0_i32_0, %c0_i32_1 : i32, i32, i32
  }
  func.func @transform_5(%arg0: i32) -> (i32, i32) {
    %c0_i32 = arith.constant 0 : i32
    %c0_i32_0 = arith.constant 0 : i32
    %c0_i32_1 = arith.constant 0 : i32
    return %c0_i32, %c0_i32_0 : i32, i32
  }
  func.func @transform_6(%arg0: i32) -> (i32, i32) {
    %c0_i32 = arith.constant 0 : i32
    %c0_i32_0 = arith.constant 0 : i32
    %c0_i32_1 = arith.constant 0 : i32
    return %c0_i32, %c0_i32_0 : i32, i32
  }
  func.func @transform_7(%arg0: i32) -> (i32, i32) {
    %c0_i32 = arith.constant 0 : i32
    %c0_i32_0 = arith.constant 0 : i32
    %c0_i32_1 = arith.constant 0 : i32
    return %c0_i32, %c0_i32_0 : i32, i32
  }
  func.func @transform_8(%arg0: i32) -> (i32, i32) {
    %c0_i32 = arith.constant 0 : i32
    %c0_i32_0 = arith.constant 0 : i32
    %c0_i32_1 = arith.constant 0 : i32
    return %c0_i32, %c0_i32_0 : i32, i32
  }
  func.func @transform_9(%arg0: i32) -> (i32, i32) {
    %c0_i32 = arith.constant 0 : i32
    %c0_i32_0 = arith.constant 0 : i32
    %c0_i32_1 = arith.constant 0 : i32
    return %c0_i32, %c0_i32_0 : i32, i32
  }
  func.func @transform_10(%arg0: i32) -> (i32, i32) {
    %c0_i32 = arith.constant 0 : i32
    %c0_i32_0 = arith.constant 0 : i32
    %c0_i32_1 = arith.constant 0 : i32
    return %c0_i32, %c0_i32_0 : i32, i32
  }
  func.func @transform_11(%arg0: i32) -> (i32, i32) {
    %c0_i32 = arith.constant 0 : i32
    %c0_i32_0 = arith.constant 0 : i32
    %c0_i32_1 = arith.constant 0 : i32
    return %c0_i32, %c0_i32_0 : i32, i32
  }
  func.func @transform_12(%arg0: i32) -> (i32, i32) {
    %c0_i32 = arith.constant 0 : i32
    %c0_i32_0 = arith.constant 0 : i32
    %c0_i32_1 = arith.constant 0 : i32
    return %c0_i32, %c0_i32_0 : i32, i32
  }
  func.func @transform_13(%arg0: i32) -> (i32, i32) {
    %c0_i32 = arith.constant 0 : i32
    %c0_i32_0 = arith.constant 0 : i32
    %c0_i32_1 = arith.constant 0 : i32
    return %c0_i32, %c0_i32_0 : i32, i32
  }
  func.func @transform_14(%arg0: i32) -> (i32, i32) {
    %c0_i32 = arith.constant 0 : i32
    %c0_i32_0 = arith.constant 0 : i32
    %c0_i32_1 = arith.constant 0 : i32
    return %c0_i32, %c0_i32_0 : i32, i32
  }
  func.func @transform_15(%arg0: i32) -> (i32, i32, i32) {
    %c0_i32 = arith.constant 0 : i32
    %c0_i32_0 = arith.constant 0 : i32
    %c0_i32_1 = arith.constant 0 : i32
    return %arg0, %c0_i32, %c0_i32_0 : i32, i32, i32
  }
}

</mosaic_0001>

<llo_original>
// kernel: tpu_custom_call.1
$region0: #{tpu_custom_call.1}
  #allocation0 [shape = 'u32[]', space=smem, size = 0x4, offset = 0x4, fixed_abs, tag = 'smem constant byte address 0x4 - core index']
  #allocation1 [shape = 'u32[144,128]{1,0:T(1,128)}', space=vmem, size = 0x12000, scoped, tag = 'internal scratch']
  #allocation2 [shape = 'f32[1,1]{1,0:T(1,128)S(1)}', space=vmem, size = 0x200, scoped, tag = 'scoped memory for tpu_custom_call.1']
  %s0 = inlined_call_operand.vmem [shape: f32[2,16,8], index: 0, kind: input, shape index: {}]
  %s1 = inlined_call_operand.vmem [shape: f32[1,16,16], index: 1, kind: input, shape index: {}]
  %s2 = inlined_call_operand.hbm [shape: f32[1,16,16], index: 2, kind: input, shape index: {}]
  %s3 = inlined_call_operand.vmem [shape: f32[1,16,1], index: 3, kind: input, shape index: {}]
  %s4 = inlined_call_operand.vmem [shape: f32[1,16,1], index: 4, kind: input, shape index: {}]
  %s5 = inlined_call_operand.vmem [shape: f32[1,32], index: 5, kind: input, shape index: {}]
  %s6 = inlined_call_operand.vmem [shape: f32[1,32], index: 6, kind: input, shape index: {}]
  %s7 = inlined_call_operand.vmem [shape: f32[32,32], index: 7, kind: input, shape index: {}]
  %s8 = inlined_call_operand.vmem [shape: f32[1,32], index: 8, kind: input, shape index: {}]
  %s9 = inlined_call_operand.vmem [shape: f32[32,32], index: 9, kind: input, shape index: {}]
  %s10 = inlined_call_operand.vmem [shape: f32[1,32], index: 10, kind: input, shape index: {}]
  %s11 = inlined_call_operand.vmem [shape: f32[32,32], index: 11, kind: input, shape index: {}]
  %s12 = inlined_call_operand.vmem [shape: f32[1,32], index: 12, kind: input, shape index: {}]
  %s13 = inlined_call_operand.vmem [shape: f32[32,1], index: 13, kind: input, shape index: {}]
  %s14 = inlined_call_operand.<no memory space> [shape: f32[1,1], index: 14, kind: input, shape index: {}]
  %s15 = inlined_call_operand.vmem [shape: f32[2,16,8], index: 15, kind: output, shape index: {}]
  %s16 = sld [smem:[#allocation0]]
  $region97: #{tpu_custom_call.1} parent=0
    _
  %s18 = ssub.s32 1, %s16
  %s19 = scalar_select 0, %s18, %s16
  %v20 = vstv %s14
  %21 = vst [vmem:[#allocation2] sm:$0x1] %v20
  $region1: #{tpu_custom_call.1} parent=0
    #allocation3 [shape = 'u8[8192]{0}', space=vmem, size = 0x2000, scoped, tag = 'input window, operand 2, single buffered']
    #allocation4 [shape = 's32[2]{0}', space=sflag, size = 0x8, scoped, tag = 'scoped memory for tpu_custom_call.1']
    %22 = vsyncpa [#allocation4], 0
    loop: start=0, step=1, limit=4
    $region2: #{tpu_custom_call.1} parent=1 // loop_pre_header
      _
    $region3: #{tpu_custom_call.1} parent=1 // loop_header
      %s24 = sphi 0, %s28
      %p25 = scmp.ge.s32.totalorder %s24, 4
      %s34 = sphi 0, %s36
      %s37 = sphi 0, %s34
      %s38 = sphi 0, %s37
      %s54 = sphi 0, %s38
      %s58 = sphi 0, %s58
      %s60 = sphi 0, %s58
      %s61 = sphi 0, %s60
      %s75 = sphi 0, %s61
      %s79 = sphi 0, %s79
      %s81 = sphi 0, %s79
      %s82 = sphi 0, %s81
      %s96 = sphi 0, %s82
      %s100 = sphi 0, %s100
      %s102 = sphi 0, %s100
      %s103 = sphi 0, %s102
      %s117 = sphi 0, %s103
      %s121 = sphi 0, %s121
      %s123 = sphi 0, %s121
      %s124 = sphi 0, %s123
      %s138 = sphi 0, %s124
      %s142 = sphi 0, %s142
      %s144 = sphi 0, %s142
      %s145 = sphi 0, %s144
      %s159 = sphi 0, %s145
      %s163 = sphi 0, %s163
      %s165 = sphi 0, %s163
      %s166 = sphi 0, %s165
      %s180 = sphi 0, %s166
      %s184 = sphi 0, %s184
      %s186 = sphi 0, %s184
      %s187 = sphi 0, %s186
      %s201 = sphi 0, %s187
      %s205 = sphi 0, %s205
      %s207 = sphi 0, %s205
      %s208 = sphi 0, %s207
      %s222 = sphi 0, %s208
      %s226 = sphi 0, %s226
      %s228 = sphi 0, %s226
      %s229 = sphi 0, %s228
      %s243 = sphi 0, %s229
      %s247 = sphi 0, %s247
      %s249 = sphi 0, %s247
      %s250 = sphi 0, %s249
      %s264 = sphi 0, %s250
      %s268 = sphi 0, %s268
      %s270 = sphi 0, %s268
      %s271 = sphi 0, %s270
      %s285 = sphi 0, %s271
      %s289 = sphi 0, %s289
      %s291 = sphi 0, %s289
      %s292 = sphi 0, %s291
      %s306 = sphi 0, %s292
      %s310 = sphi 0, %s310
      %s312 = sphi 0, %s310
      %s313 = sphi 0, %s312
      %s327 = sphi 0, %s313
      %s331 = sphi 0, %s331
      %s333 = sphi 0, %s331
      %s334 = sphi 0, %s333
      %s348 = sphi 0, %s334
      %s354 = sphi 0, %s356
      %s357 = sphi 0, %s354
      %s358 = sphi 0, %s357
      %s374 = sphi 0, %s358
    $region4: #{tpu_custom_call.1} parent=1 // loop_header_branch
      %27 = sbr.rel (%p25) target = $region8
    $region5: #{tpu_custom_call.1} parent=1 // loop_body
      %s29 = ssub.s32 %s24, 1
      %s30 = ssub.s32 %s24, 2
      %s31 = sadd.s32 %s24, 1
      %s32 = ssub.s32 %s24, %s31
      %p33 = scmp.eq.s32.totalorder %s32, 0
      %s35 = sadd.s32 %s34, 1
      %s36 = scalar_select %p33, %s34, %s35
      %p39 = pneg %p33
      %p40 = scmp.eq.s32.totalorder %s24, 1
      %p41 = por %p39, %p40
      %p42 = scmp.ne.s32.totalorder %s34, %s37
      %p43 = scmp.eq.s32.totalorder %s24, 0
      %p44 = por %p42, %p43
      %p45 = scmp.ne.s32.totalorder %s34, %s37
      %p46 = scmp.eq.s32.totalorder %s29, 1
      %p47 = por %p45, %p46
      %p48 = scmp.ne.s32.totalorder %s37, %s38
      %p49 = scmp.eq.s32.totalorder %s29, 0
      %p50 = por %p48, %p49
      %p51 = scmp.ne.s32.totalorder %s37, %s38
      %p52 = scmp.eq.s32.totalorder %s30, 1
      %p53 = por %p51, %p52
      %p55 = scmp.ne.s32.totalorder %s38, %s54
      %p56 = scmp.eq.s32.totalorder %s30, 0
      %p57 = por %p55, %p56
      %s59 = sadd.s32 %s58, 1
      %p62 = scmp.eq.s32.totalorder %s24, 1
      %p63 = scmp.ne.s32.totalorder %s58, %s60
      %p64 = scmp.eq.s32.totalorder %s24, 0
      %p65 = por %p63, %p64
      %p66 = scmp.ne.s32.totalorder %s58, %s60
      %p67 = scmp.eq.s32.totalorder %s29, 1
      %p68 = por %p66, %p67
      %p69 = scmp.ne.s32.totalorder %s60, %s61
      %p70 = scmp.eq.s32.totalorder %s29, 0
      %p71 = por %p69, %p70
      %p72 = scmp.ne.s32.totalorder %s60, %s61
      %p73 = scmp.eq.s32.totalorder %s30, 1
      %p74 = por %p72, %p73
      %p76 = scmp.ne.s32.totalorder %s61, %s75
      %p77 = scmp.eq.s32.totalorder %s30, 0
      %p78 = por %p76, %p77
      %s80 = sadd.s32 %s79, 1
      %p83 = scmp.eq.s32.totalorder %s24, 1
      %p84 = scmp.ne.s32.totalorder %s79, %s81
      %p85 = scmp.eq.s32.totalorder %s24, 0
      %p86 = por %p84, %p85
      %p87 = scmp.ne.s32.totalorder %s79, %s81
      %p88 = scmp.eq.s32.totalorder %s29, 1
      %p89 = por %p87, %p88
      %p90 = scmp.ne.s32.totalorder %s81, %s82
      %p91 = scmp.eq.s32.totalorder %s29, 0
      %p92 = por %p90, %p91
      %p93 = scmp.ne.s32.totalorder %s81, %s82
      %p94 = scmp.eq.s32.totalorder %s30, 1
      %p95 = por %p93, %p94
      %p97 = scmp.ne.s32.totalorder %s82, %s96
      %p98 = scmp.eq.s32.totalorder %s30, 0
      %p99 = por %p97, %p98
      %s101 = sadd.s32 %s100, 1
      %p104 = scmp.eq.s32.totalorder %s24, 1
      %p105 = scmp.ne.s32.totalorder %s100, %s102
      %p106 = scmp.eq.s32.totalorder %s24, 0
      %p107 = por %p105, %p106
      %p108 = scmp.ne.s32.totalorder %s100, %s102
      %p109 = scmp.eq.s32.totalorder %s29, 1
      %p110 = por %p108, %p109
      %p111 = scmp.ne.s32.totalorder %s102, %s103
      %p112 = scmp.eq.s32.totalorder %s29, 0
      %p113 = por %p111, %p112
      %p114 = scmp.ne.s32.totalorder %s102, %s103
      %p115 = scmp.eq.s32.totalorder %s30, 1
      %p116 = por %p114, %p115
      %p118 = scmp.ne.s32.totalorder %s103, %s117
      %p119 = scmp.eq.s32.totalorder %s30, 0
      %p120 = por %p118, %p119
      %s122 = sadd.s32 %s121, 1
      %p125 = scmp.eq.s32.totalorder %s24, 1
      %p126 = scmp.ne.s32.totalorder %s121, %s123
      %p127 = scmp.eq.s32.totalorder %s24, 0
      %p128 = por %p126, %p127
      %p129 = scmp.ne.s32.totalorder %s121, %s123
      %p130 = scmp.eq.s32.totalorder %s29, 1
      %p131 = por %p129, %p130
      %p132 = scmp.ne.s32.totalorder %s123, %s124
      %p133 = scmp.eq.s32.totalorder %s29, 0
      %p134 = por %p132, %p133
      %p135 = scmp.ne.s32.totalorder %s123, %s124
      %p136 = scmp.eq.s32.totalorder %s30, 1
      %p137 = por %p135, %p136
      %p139 = scmp.ne.s32.totalorder %s124, %s138
      %p140 = scmp.eq.s32.totalorder %s30, 0
      %p141 = por %p139, %p140
      %s143 = sadd.s32 %s142, 1
      %p146 = scmp.eq.s32.totalorder %s24, 1
      %p147 = scmp.ne.s32.totalorder %s142, %s144
      %p148 = scmp.eq.s32.totalorder %s24, 0
      %p149 = por %p147, %p148
      %p150 = scmp.ne.s32.totalorder %s142, %s144
      %p151 = scmp.eq.s32.totalorder %s29, 1
      %p152 = por %p150, %p151
      %p153 = scmp.ne.s32.totalorder %s144, %s145
      %p154 = scmp.eq.s32.totalorder %s29, 0
      %p155 = por %p153, %p154
      %p156 = scmp.ne.s32.totalorder %s144, %s145
      %p157 = scmp.eq.s32.totalorder %s30, 1
      %p158 = por %p156, %p157
      %p160 = scmp.ne.s32.totalorder %s145, %s159
      %p161 = scmp.eq.s32.totalorder %s30, 0
      %p162 = por %p160, %p161
      %s164 = sadd.s32 %s163, 1
      %p167 = scmp.eq.s32.totalorder %s24, 1
      %p168 = scmp.ne.s32.totalorder %s163, %s165
      %p169 = scmp.eq.s32.totalorder %s24, 0
      %p170 = por %p168, %p169
      %p171 = scmp.ne.s32.totalorder %s163, %s165
      %p172 = scmp.eq.s32.totalorder %s29, 1
      %p173 = por %p171, %p172
      %p174 = scmp.ne.s32.totalorder %s165, %s166
      %p175 = scmp.eq.s32.totalorder %s29, 0
      %p176 = por %p174, %p175
      %p177 = scmp.ne.s32.totalorder %s165, %s166
      %p178 = scmp.eq.s32.totalorder %s30, 1
      %p179 = por %p177, %p178
      %p181 = scmp.ne.s32.totalorder %s166, %s180
      %p182 = scmp.eq.s32.totalorder %s30, 0
      %p183 = por %p181, %p182
      %s185 = sadd.s32 %s184, 1
      %p188 = scmp.eq.s32.totalorder %s24, 1
      %p189 = scmp.ne.s32.totalorder %s184, %s186
      %p190 = scmp.eq.s32.totalorder %s24, 0
      %p191 = por %p189, %p190
      %p192 = scmp.ne.s32.totalorder %s184, %s186
      %p193 = scmp.eq.s32.totalorder %s29, 1
      %p194 = por %p192, %p193
      %p195 = scmp.ne.s32.totalorder %s186, %s187
      %p196 = scmp.eq.s32.totalorder %s29, 0
      %p197 = por %p195, %p196
      %p198 = scmp.ne.s32.totalorder %s186, %s187
      %p199 = scmp.eq.s32.totalorder %s30, 1
      %p200 = por %p198, %p199
      %p202 = scmp.ne.s32.totalorder %s187, %s201
      %p203 = scmp.eq.s32.totalorder %s30, 0
      %p204 = por %p202, %p203
      %s206 = sadd.s32 %s205, 1
      %p209 = scmp.eq.s32.totalorder %s24, 1
      %p210 = scmp.ne.s32.totalorder %s205, %s207
      %p211 = scmp.eq.s32.totalorder %s24, 0
      %p212 = por %p210, %p211
      %p213 = scmp.ne.s32.totalorder %s205, %s207
      %p214 = scmp.eq.s32.totalorder %s29, 1
      %p215 = por %p213, %p214
      %p216 = scmp.ne.s32.totalorder %s207, %s208
      %p217 = scmp.eq.s32.totalorder %s29, 0
      %p218 = por %p216, %p217
      %p219 = scmp.ne.s32.totalorder %s207, %s208
      %p220 = scmp.eq.s32.totalorder %s30, 1
      %p221 = por %p219, %p220
      %p223 = scmp.ne.s32.totalorder %s208, %s222
      %p224 = scmp.eq.s32.totalorder %s30, 0
      %p225 = por %p223, %p224
      %s227 = sadd.s32 %s226, 1
      %p230 = scmp.eq.s32.totalorder %s24, 1
      %p231 = scmp.ne.s32.totalorder %s226, %s228
      %p232 = scmp.eq.s32.totalorder %s24, 0
      %p233 = por %p231, %p232
      %p234 = scmp.ne.s32.totalorder %s226, %s228
      %p235 = scmp.eq.s32.totalorder %s29, 1
      %p236 = por %p234, %p235
      %p237 = scmp.ne.s32.totalorder %s228, %s229
      %p238 = scmp.eq.s32.totalorder %s29, 0
      %p239 = por %p237, %p238
      %p240 = scmp.ne.s32.totalorder %s228, %s229
      %p241 = scmp.eq.s32.totalorder %s30, 1
      %p242 = por %p240, %p241
      %p244 = scmp.ne.s32.totalorder %s229, %s243
      %p245 = scmp.eq.s32.totalorder %s30, 0
      %p246 = por %p244, %p245
      %s248 = sadd.s32 %s247, 1
      %p251 = scmp.eq.s32.totalorder %s24, 1
      %p252 = scmp.ne.s32.totalorder %s247, %s249
      %p253 = scmp.eq.s32.totalorder %s24, 0
      %p254 = por %p252, %p253
      %p255 = scmp.ne.s32.totalorder %s247, %s249
      %p256 = scmp.eq.s32.totalorder %s29, 1
      %p257 = por %p255, %p256
      %p258 = scmp.ne.s32.totalorder %s249, %s250
      %p259 = scmp.eq.s32.totalorder %s29, 0
      %p260 = por %p258, %p259
      %p261 = scmp.ne.s32.totalorder %s249, %s250
      %p262 = scmp.eq.s32.totalorder %s30, 1
      %p263 = por %p261, %p262
      %p265 = scmp.ne.s32.totalorder %s250, %s264
      %p266 = scmp.eq.s32.totalorder %s30, 0
      %p267 = por %p265, %p266
      %s269 = sadd.s32 %s268, 1
      %p272 = scmp.eq.s32.totalorder %s24, 1
      %p273 = scmp.ne.s32.totalorder %s268, %s270
      %p274 = scmp.eq.s32.totalorder %s24, 0
      %p275 = por %p273, %p274
      %p276 = scmp.ne.s32.totalorder %s268, %s270
      %p277 = scmp.eq.s32.totalorder %s29, 1
      %p278 = por %p276, %p277
      %p279 = scmp.ne.s32.totalorder %s270, %s271
      %p280 = scmp.eq.s32.totalorder %s29, 0
      %p281 = por %p279, %p280
      %p282 = scmp.ne.s32.totalorder %s270, %s271
      %p283 = scmp.eq.s32.totalorder %s30, 1
      %p284 = por %p282, %p283
      %p286 = scmp.ne.s32.totalorder %s271, %s285
      %p287 = scmp.eq.s32.totalorder %s30, 0
      %p288 = por %p286, %p287
      %s290 = sadd.s32 %s289, 1
      %p293 = scmp.eq.s32.totalorder %s24, 1
      %p294 = scmp.ne.s32.totalorder %s289, %s291
      %p295 = scmp.eq.s32.totalorder %s24, 0
      %p296 = por %p294, %p295
      %p297 = scmp.ne.s32.totalorder %s289, %s291
      %p298 = scmp.eq.s32.totalorder %s29, 1
      %p299 = por %p297, %p298
      %p300 = scmp.ne.s32.totalorder %s291, %s292
      %p301 = scmp.eq.s32.totalorder %s29, 0
      %p302 = por %p300, %p301
      %p303 = scmp.ne.s32.totalorder %s291, %s292
      %p304 = scmp.eq.s32.totalorder %s30, 1
      %p305 = por %p303, %p304
      %p307 = scmp.ne.s32.totalorder %s292, %s306
      %p308 = scmp.eq.s32.totalorder %s30, 0
      %p309 = por %p307, %p308
      %s311 = sadd.s32 %s310, 1
      %p314 = scmp.eq.s32.totalorder %s24, 1
      %p315 = scmp.ne.s32.totalorder %s310, %s312
      %p316 = scmp.eq.s32.totalorder %s24, 0
      %p317 = por %p315, %p316
      %p318 = scmp.ne.s32.totalorder %s310, %s312
      %p319 = scmp.eq.s32.totalorder %s29, 1
      %p320 = por %p318, %p319
      %p321 = scmp.ne.s32.totalorder %s312, %s313
      %p322 = scmp.eq.s32.totalorder %s29, 0
      %p323 = por %p321, %p322
      %p324 = scmp.ne.s32.totalorder %s312, %s313
      %p325 = scmp.eq.s32.totalorder %s30, 1
      %p326 = por %p324, %p325
      %p328 = scmp.ne.s32.totalorder %s313, %s327
      %p329 = scmp.eq.s32.totalorder %s30, 0
      %p330 = por %p328, %p329
      %s332 = sadd.s32 %s331, 1
      %p335 = scmp.eq.s32.totalorder %s24, 1
      %p336 = scmp.ne.s32.totalorder %s331, %s333
      %p337 = scmp.eq.s32.totalorder %s24, 0
      %p338 = por %p336, %p337
      %p339 = scmp.ne.s32.totalorder %s331, %s333
      %p340 = scmp.eq.s32.totalorder %s29, 1
      %p341 = por %p339, %p340
      %p342 = scmp.ne.s32.totalorder %s333, %s334
      %p343 = scmp.eq.s32.totalorder %s29, 0
      %p344 = por %p342, %p343
      %p345 = scmp.ne.s32.totalorder %s333, %s334
      %p346 = scmp.eq.s32.totalorder %s30, 1
      %p347 = por %p345, %p346
      %p349 = scmp.ne.s32.totalorder %s334, %s348
      %p350 = scmp.eq.s32.totalorder %s30, 0
      %p351 = por %p349, %p350
      %s352 = ssub.s32 %s24, %s31
      %p353 = scmp.eq.s32.totalorder %s352, 0
      %s355 = sadd.s32 %s354, 1
      %s356 = scalar_select %p353, %s354, %s355
      %p359 = pneg %p353
      %p360 = scmp.eq.s32.totalorder %s24, 1
      %p361 = por %p359, %p360
      %p362 = scmp.ne.s32.totalorder %s354, %s357
      %p363 = scmp.eq.s32.totalorder %s24, 0
      %p364 = por %p362, %p363
      %p365 = scmp.ne.s32.totalorder %s354, %s357
      %p366 = scmp.eq.s32.totalorder %s29, 1
      %p367 = por %p365, %p366
      %p368 = scmp.ne.s32.totalorder %s357, %s358
      %p369 = scmp.eq.s32.totalorder %s29, 0
      %p370 = por %p368, %p369
      %p371 = scmp.ne.s32.totalorder %s357, %s358
      %p372 = scmp.eq.s32.totalorder %s30, 1
      %p373 = por %p371, %p372
      %p375 = scmp.ne.s32.totalorder %s358, %s374
      %p376 = scmp.eq.s32.totalorder %s30, 0
      %p377 = por %p375, %p376
      %p378 = scmp.le.s32.totalorder 1, %s24
      %p379 = scmp.lt.s32.totalorder %s24, 3
      %p380 = pnand %p378, %p379
      %p381 = pneg %p380
      // Predicated region
      $region9: #{tpu_custom_call.1} parent=5 // pred_check
        _
      $region10: #{tpu_custom_call.1} parent=5 // pred_check_branch
        %383 = sbr.rel (%p380) target = $region12
      $region11: #{tpu_custom_call.1} parent=5 // pred_region
        %s384 = ssub.s32 %s24, 1
        // Predicated region
        $region13: #{tpu_custom_call.1} parent=11 // pred_check
          %p385 = pneg %p71
        $region14: #{tpu_custom_call.1} parent=11 // pred_check_branch
          %387 = sbr.rel (%p385) target = $region16
        $region15: #{tpu_custom_call.1} parent=11 // pred_region
          _
        $region16: #{tpu_custom_call.1} parent=11 // pred_fallthru
          _
        // Predicated region
        $region17: #{tpu_custom_call.1} parent=11 // pred_check
          %p388 = pneg %p92
        $region18: #{tpu_custom_call.1} parent=11 // pred_check_branch
          %390 = sbr.rel (%p388) target = $region20
        $region19: #{tpu_custom_call.1} parent=11 // pred_region
          %s392 = ssub.s32 256, 256
          %393 = vsyncadd [#allocation4], %s392
          %s394 = sshll.u32 [#allocation3], 4
          %s395 = int_to_ptr.vmem [resolvable:$true] %s394
          %400 = dma.hbm_to_vmem [thread:$0]  %s2, 256, %s395, [#allocation4], 128, 128, 8
        $region20: #{tpu_custom_call.1} parent=11 // pred_fallthru
          _
        // Predicated region
        $region21: #{tpu_custom_call.1} parent=11 // pred_check
          %p401 = pneg %p113
        $region22: #{tpu_custom_call.1} parent=11 // pred_check_branch
          %403 = sbr.rel (%p401) target = $region24
        $region23: #{tpu_custom_call.1} parent=11 // pred_region
          _
        $region24: #{tpu_custom_call.1} parent=11 // pred_fallthru
          _
        // Predicated region
        $region25: #{tpu_custom_call.1} parent=11 // pred_check
          %p404 = pneg %p134
        $region26: #{tpu_custom_call.1} parent=11 // pred_check_branch
          %406 = sbr.rel (%p404) target = $region28
        $region27: #{tpu_custom_call.1} parent=11 // pred_region
          _
        $region28: #{tpu_custom_call.1} parent=11 // pred_fallthru
          _
        // Predicated region
        $region29: #{tpu_custom_call.1} parent=11 // pred_check
          %p407 = pneg %p155
        $region30: #{tpu_custom_call.1} parent=11 // pred_check_branch
          %409 = sbr.rel (%p407) target = $region32
        $region31: #{tpu_custom_call.1} parent=11 // pred_region
          _
        $region32: #{tpu_custom_call.1} parent=11 // pred_fallthru
          _
        // Predicated region
        $region33: #{tpu_custom_call.1} parent=11 // pred_check
          %p410 = pneg %p176
        $region34: #{tpu_custom_call.1} parent=11 // pred_check_branch
          %412 = sbr.rel (%p410) target = $region36
        $region35: #{tpu_custom_call.1} parent=11 // pred_region
          _
        $region36: #{tpu_custom_call.1} parent=11 // pred_fallthru
          _
        // Predicated region
        $region37: #{tpu_custom_call.1} parent=11 // pred_check
          %p413 = pneg %p197
        $region38: #{tpu_custom_call.1} parent=11 // pred_check_branch
          %415 = sbr.rel (%p413) target = $region40
        $region39: #{tpu_custom_call.1} parent=11 // pred_region
          _
        $region40: #{tpu_custom_call.1} parent=11 // pred_fallthru
          _
        // Predicated region
        $region41: #{tpu_custom_call.1} parent=11 // pred_check
          %p416 = pneg %p218
        $region42: #{tpu_custom_call.1} parent=11 // pred_check_branch
          %418 = sbr.rel (%p416) target = $region44
        $region43: #{tpu_custom_call.1} parent=11 // pred_region
          _
        $region44: #{tpu_custom_call.1} parent=11 // pred_fallthru
          _
        // Predicated region
        $region45: #{tpu_custom_call.1} parent=11 // pred_check
          %p419 = pneg %p239
        $region46: #{tpu_custom_call.1} parent=11 // pred_check_branch
          %421 = sbr.rel (%p419) target = $region48
        $region47: #{tpu_custom_call.1} parent=11 // pred_region
          _
        $region48: #{tpu_custom_call.1} parent=11 // pred_fallthru
          _
        // Predicated region
        $region49: #{tpu_custom_call.1} parent=11 // pred_check
          %p422 = pneg %p260
        $region50: #{tpu_custom_call.1} parent=11 // pred_check_branch
          %424 = sbr.rel (%p422) target = $region52
        $region51: #{tpu_custom_call.1} parent=11 // pred_region
          _
        $region52: #{tpu_custom_call.1} parent=11 // pred_fallthru
          _
        // Predicated region
        $region53: #{tpu_custom_call.1} parent=11 // pred_check
          %p425 = pneg %p281
        $region54: #{tpu_custom_call.1} parent=11 // pred_check_branch
          %427 = sbr.rel (%p425) target = $region56
        $region55: #{tpu_custom_call.1} parent=11 // pred_region
          _
        $region56: #{tpu_custom_call.1} parent=11 // pred_fallthru
          _
        // Predicated region
        $region57: #{tpu_custom_call.1} parent=11 // pred_check
          %p428 = pneg %p302
        $region58: #{tpu_custom_call.1} parent=11 // pred_check_branch
          %430 = sbr.rel (%p428) target = $region60
        $region59: #{tpu_custom_call.1} parent=11 // pred_region
          _
        $region60: #{tpu_custom_call.1} parent=11 // pred_fallthru
          _
        // Predicated region
        $region61: #{tpu_custom_call.1} parent=11 // pred_check
          %p431 = pneg %p323
        $region62: #{tpu_custom_call.1} parent=11 // pred_check_branch
          %433 = sbr.rel (%p431) target = $region64
        $region63: #{tpu_custom_call.1} parent=11 // pred_region
          _
        $region64: #{tpu_custom_call.1} parent=11 // pred_fallthru
          _
        // Predicated region
        $region65: #{tpu_custom_call.1} parent=11 // pred_check
          %p434 = pneg %p344
        $region66: #{tpu_custom_call.1} parent=11 // pred_check_branch
          %436 = sbr.rel (%p434) target = $region68
        $region67: #{tpu_custom_call.1} parent=11 // pred_region
          _
        $region68: #{tpu_custom_call.1} parent=11 // pred_fallthru
          _
      $region12: #{tpu_custom_call.1} parent=5 // pred_fallthru
        _
      %p437 = scmp.lt.s32.totalorder %s24, 2
      // Predicated region
      $region69: #{tpu_custom_call.1} parent=5 // pred_check
        %p438 = pneg %p437
      $region70: #{tpu_custom_call.1} parent=5 // pred_check_branch
        %440 = sbr.rel (%p438) target = $region72
      $region71: #{tpu_custom_call.1} parent=5 // pred_region
        // Predicated region
        $region73: #{tpu_custom_call.1} parent=71 // pred_check
          %p441 = pneg %p44
        $region74: #{tpu_custom_call.1} parent=71 // pred_check_branch
          %443 = sbr.rel (%p441) target = $region76
        $region75: #{tpu_custom_call.1} parent=71 // pred_region
          %p444 = scmp.lt.s32.totalorder %s24, 1
          %s445 = scalar_select %p444, %s24, 1
          %s446 = smul.addr %s445, 2
          %s447 = smul.addr %s446, 8
          %s448 = scalar_lea.vmem %s0, %s447
        $region76: #{tpu_custom_call.1} parent=71 // pred_fallthru
          _
      $region72: #{tpu_custom_call.1} parent=5 // pred_fallthru
        _
      %p449 = scmp.le.s32.totalorder 1, %s24
      %p450 = scmp.lt.s32.totalorder %s24, 3
      %p451 = pnand %p449, %p450
      %p452 = pneg %p451
      // Predicated region
      $region77: #{tpu_custom_call.1} parent=5 // pred_check
        _
      $region78: #{tpu_custom_call.1} parent=5 // pred_check_branch
        %454 = sbr.rel (%p451) target = $region80
      $region79: #{tpu_custom_call.1} parent=5 // pred_region
        %s455 = ssub.s32 %s24, 1
        // Predicated region
        $region81: #{tpu_custom_call.1} parent=79 // pred_check
          %p456 = pneg %p92
        $region82: #{tpu_custom_call.1} parent=79 // pred_check_branch
          %458 = sbr.rel (%p456) target = $region84
        $region83: #{tpu_custom_call.1} parent=79 // pred_region
          %459 = dma.done [#allocation4], 256
        $region84: #{tpu_custom_call.1} parent=79 // pred_fallthru
          _
        %p460 = scmp.lt.s32.totalorder %s29, 1
        %s461 = scalar_select %p460, %s29, 1
        %s462 = smul.addr %s461, 2
        %s463 = smul.addr %s462, 8
        %s464 = scalar_lea.vmem %s0, %s463
        %p465 = pneg %p50
        %p466 = pneg %p47
        %p467 = pneg %p71
        %p468 = pneg %p68
        %p469 = pneg %p92
        %p470 = pneg %p89
        %p471 = pneg %p113
        %p472 = pneg %p110
        %p473 = pneg %p134
        %p474 = pneg %p131
        %p475 = pneg %p155
        %p476 = pneg %p152
        %p477 = pneg %p176
        %p478 = pneg %p173
        %p479 = pneg %p197
        %p480 = pneg %p194
        %p481 = pneg %p218
        %p482 = pneg %p215
        %p483 = pneg %p239
        %p484 = pneg %p236
        %p485 = pneg %p260
        %p486 = pneg %p257
        %p487 = pneg %p281
        %p488 = pneg %p278
        %p489 = pneg %p302
        %p490 = pneg %p299
        %p491 = pneg %p323
        %p492 = pneg %p320
        %p493 = pneg %p344
        %p494 = pneg %p341
        %p495 = pneg %p370
        %p496 = pneg %p367
        %p497 = scmp.lt.s32.totalorder %s29, 1
        %s498 = scalar_select %p497, %s29, 1
        %s499 = smul.addr %s498, 2
        %s500 = smul.addr %s499, 8
        %s501 = scalar_lea.vmem %s15, %s500
        %p502 = scmp.lt.s32.totalorder %s29, 1
        %s503 = scalar_select %p502, %s29, 1
        %s504 = smul.addr %s503, 2
        %s505 = smul.addr %s504, 8
        %s506 = scalar_lea.vmem %s0, %s505
        %p507 = scmp.lt.s32.totalorder %s29, 1
        %s508 = scalar_select %p507, %s29, 1
        %s509 = smul.addr %s508, 2
        %s510 = smul.addr %s509, 8
        %s511 = scalar_lea.vmem %s15, %s510
        %v512 = vld [vmem:[%s506] sm:$0xff]
        %v513 = vld [vmem:[%s506 + $0x8] sm:$0xff]
        %v514 = vld [vmem:[%s1] sm:$0xff]
        %v515 = vld [vmem:[%s1 + $0x8] sm:$0xff]
        %v516 = vld [vmem:[#allocation3] sm:$0xff]
        %v517 = vld [vmem:[#allocation3 + $0x8] sm:$0xff]
        %v518 = vld [vmem:[%s3] sm:$0xff]
        %v519 = vld [vmem:[%s3 + $0x8] sm:$0xff]
        %v520 = vld [vmem:[%s4] sm:$0xff]
        %v521 = vld [vmem:[%s4 + $0x8] sm:$0xff]
        %v522 = vld [vmem:[%s5] sm:$0x1]
        %v523 = vld [vmem:[%s6] sm:$0x1]
        %vm524 = vcmask 130048
        %v526 = vsel %vm524, %v516, 0
        %v529 = vsel %vm524, %v517, 0
        %531 = vmatprep.subr.mxu0 0.0
        %532 = vmatpush1.msra.mxu0 0.0
        %533 = vmatprep.subr.mxu0 0.0
        %534 = vmatpush1.msra.mxu0 0.0
        %535 = vmatprep.subr.mxu0 0.0
        %536 = vmatpush1.msra.mxu0 0.0
        %537 = vmatprep.subr.mxu0 0.0
        %538 = vmatpush1.msra.mxu0 0.0
        %539 = vmatprep.subr.mxu0 0.0
        %540 = vmatpush1.msra.mxu0 0.0
        %541 = vmatprep.subr.mxu0 0.0
        %542 = vmatpush1.msra.mxu0 0.0
        %543 = vmatprep.subr.mxu0 0.0
        %544 = vmatpush1.msra.mxu0 0.0
        %545 = vmatprep.subr.mxu0 0.0
        %546 = vmatpush1.msra.mxu0 0.0
        %547 = vmatprep.subr.mxu0 0.0
        %548 = vmatpush1.msra.mxu0 0.0
        %549 = vmatprep.subr.mxu0 0.0
        %550 = vmatpush1.msra.mxu0 0.0
        %551 = vmatprep.subr.mxu0 0.0
        %552 = vmatpush1.msra.mxu0 0.0
        %553 = vmatprep.subr.mxu0 0.0
        %554 = vmatpush1.msra.mxu0 0.0
        %555 = vmatprep.subr.mxu0 0.0
        %556 = vmatpush1.msra.mxu0 0.0
        %557 = vmatprep.subr.mxu0 0.0
        %558 = vmatpush1.msra.mxu0 0.0
        %559 = vmatprep.subr.mxu0 0.0
        %560 = vmatpush1.msra.mxu0 %v513
        %561 = vmatprep.subr.mxu0 0.0
        %562 = vmatpush1.msra.mxu0 %v512
        %563 = vmatprep.subr.mxu0 0.0
        %564 = vmatpush2.msra.mxu0 0.0
        %565 = vmatprep.subr.mxu0 0.0
        %566 = vmatpush2.msra.mxu0 0.0
        %567 = vmatprep.subr.mxu0 0.0
        %568 = vmatpush2.msra.mxu0 0.0
        %569 = vmatprep.subr.mxu0 0.0
        %570 = vmatpush2.msra.mxu0 0.0
        %571 = vmatprep.subr.mxu0 0.0
        %572 = vmatpush2.msra.mxu0 0.0
        %573 = vmatprep.subr.mxu0 0.0
        %574 = vmatpush2.msra.mxu0 0.0
        %575 = vmatprep.subr.mxu0 0.0
        %576 = vmatpush2.msra.mxu0 0.0
        %577 = vmatprep.subr.mxu0 0.0
        %578 = vmatpush2.msra.mxu0 0.0
        %579 = vmatprep.subr.mxu0 0.0
        %580 = vmatpush2.msra.mxu0 0.0
        %581 = vmatprep.subr.mxu0 0.0
        %582 = vmatpush2.msra.mxu0 0.0
        %583 = vmatprep.subr.mxu0 0.0
        %584 = vmatpush2.msra.mxu0 0.0
        %585 = vmatprep.subr.mxu0 0.0
        %586 = vmatpush2.msra.mxu0 0.0
        %587 = vmatprep.subr.mxu0 0.0
        %588 = vmatpush2.msra.mxu0 0.0
        %589 = vmatprep.subr.mxu0 0.0
        %590 = vmatpush2.msra.mxu0 0.0
        %591 = vmatprep.subr.mxu0 0.0
        %592 = vmatpush2.msra.mxu0 0.0
        %593 = vmatprep.subr.mxu0 0.0
        %594 = vmatpush2.msra.mxu0 0.0
        %595 = vmatprep.mubr.f32.mxu0 0.0
        %596 = vmatmul.mubr.f32.gmra.mxu0 %v526
        %v597 = vpop.f32.mrf.mxu0
        %v598 = vadd.f32 0.0, %v597
        %v599 = vpop.f32.mrf.mxu0
        %600 = vmatprep.mubr.f32.mxu0 0.0
        %601 = vmatmul.mubr.f32.gmra.mxu0 %v529
        %v602 = vpop.f32.mrf.mxu0
        %v603 = vadd.f32 0.0, %v602
        %v604 = vpop.f32.mrf.mxu0
        %605 = vdwg.mxu0
        %607 = vset.pattern.permute.xlu0 0
        %608 = vperm.xlu0 %607, %v518
        %v609 = vpop.permute.xlu0 %608
        %612 = vset.pattern.permute.xlu0 0
        %613 = vperm.xlu0 %612, %v519
        %v614 = vpop.permute.xlu0 %613
        %v616 = vrcp.pop %v609
        %v617 = vmul.f32 %v598, %v616
        %v618 = vrcp.pop %v614
        %v619 = vmul.f32 %v603, %v618
        %vm620 = vcmp.ne.f32.partialorder %v617, %v617
        %vm621 = vcmp.ne.f32.partialorder %v619, %v619
        %v622 = vsel %vm620, 6.0, %v617
        %v623 = vsel %vm621, 6.0, %v619
        %v624 = vand.u32 2147483647, %v622
        %v625 = vand.u32 2147483647, %v623
        %vm626 = vcmp.eq.f32.partialorder %v624, inf
        %vm627 = vcmp.eq.f32.partialorder %v625, inf
        %v628 = vsel %vm626, 0.0, %v622
        %v629 = vsel %vm627, 0.0, %v623
        %vm630 = vcmp.gt.f32.partialorder %v628, 6.0
        %vm631 = vcmp.gt.f32.partialorder %v629, 6.0
        %v632 = vsel %vm630, 6.0, %v628
        %v633 = vsel %vm631, 6.0, %v629
        %635 = vset.pattern.permute.xlu0 0
        %636 = vperm.xlu0 %635, %v632
        %v637 = vpop.permute.xlu0 %636
        %640 = vset.pattern.permute.xlu0 0
        %641 = vperm.xlu0 %640, %v633
        %v642 = vpop.permute.xlu0 %641
        %v645 = vlaneseq
        %v646 = vshrl.u32 %v645, 7
        %v647 = vsub.s32 0, %v646
        %v648 = vrot.slane %v522, %v647
        %v650 = vmul.f32 %v637, %v648
        %v651 = vmul.f32 %v642, %v648
        %652 = vset.pattern.permute.xlu0 1
        %653 = vperm.xlu0 %652, %v632
        %v654 = vpop.permute.xlu0 %653
        %656 = vset.pattern.permute.xlu0 1
        %657 = vperm.xlu0 %656, %v633
        %v658 = vpop.permute.xlu0 %657
        %v660 = vmul.f32 %v654, %v648
        %v661 = vmul.f32 %v658, %v648
        %662 = vset.pattern.permute.xlu0 2
        %663 = vperm.xlu0 %662, %v632
        %v664 = vpop.permute.xlu0 %663
        %666 = vset.pattern.permute.xlu0 2
        %667 = vperm.xlu0 %666, %v633
        %v668 = vpop.permute.xlu0 %667
        %v670 = vmul.f32 %v664, %v648
        %v671 = vmul.f32 %v668, %v648
        %672 = vset.pattern.permute.xlu0 3
        %673 = vperm.xlu0 %672, %v632
        %v674 = vpop.permute.xlu0 %673
        %676 = vset.pattern.permute.xlu0 3
        %677 = vperm.xlu0 %676, %v633
        %v678 = vpop.permute.xlu0 %677
        %v680 = vmul.f32 %v674, %v648
        %v681 = vmul.f32 %v678, %v648
        %682 = vset.pattern.permute.xlu0 4
        %683 = vperm.xlu0 %682, %v632
        %v684 = vpop.permute.xlu0 %683
        %686 = vset.pattern.permute.xlu0 4
        %687 = vperm.xlu0 %686, %v633
        %v688 = vpop.permute.xlu0 %687
        %v690 = vmul.f32 %v684, %v648
        %v691 = vmul.f32 %v688, %v648
        %692 = vset.pattern.permute.xlu0 5
        %693 = vperm.xlu0 %692, %v632
        %v694 = vpop.permute.xlu0 %693
        %696 = vset.pattern.permute.xlu0 5
        %697 = vperm.xlu0 %696, %v633
        %v698 = vpop.permute.xlu0 %697
        %v700 = vmul.f32 %v694, %v648
        %v701 = vmul.f32 %v698, %v648
        %702 = vset.pattern.permute.xlu0 6
        %703 = vperm.xlu0 %702, %v632
        %v704 = vpop.permute.xlu0 %703
        %706 = vset.pattern.permute.xlu0 6
        %707 = vperm.xlu0 %706, %v633
        %v708 = vpop.permute.xlu0 %707
        %v710 = vmul.f32 %v704, %v648
        %v711 = vmul.f32 %v708, %v648
        %712 = vset.pattern.permute.xlu0 7
        %713 = vperm.xlu0 %712, %v632
        %v714 = vpop.permute.xlu0 %713
        %716 = vset.pattern.permute.xlu0 7
        %717 = vperm.xlu0 %716, %v633
        %v718 = vpop.permute.xlu0 %717
        %v720 = vmul.f32 %v714, %v648
        %v721 = vmul.f32 %v718, %v648
        %v723 = vlaneseq
        %v724 = vshrl.u32 %v723, 7
        %v725 = vsub.s32 0, %v724
        %v726 = vrot.slane %v523, %v725
        %v728 = vadd.f32 %v650, %v726
        %v729 = vadd.f32 %v651, %v726
        %v730 = vadd.f32 %v660, %v726
        %v731 = vadd.f32 %v661, %v726
        %v732 = vadd.f32 %v670, %v726
        %v733 = vadd.f32 %v671, %v726
        %v734 = vadd.f32 %v680, %v726
        %v735 = vadd.f32 %v681, %v726
        %v736 = vadd.f32 %v690, %v726
        %v737 = vadd.f32 %v691, %v726
        %v738 = vadd.f32 %v700, %v726
        %v739 = vadd.f32 %v701, %v726
        %v740 = vadd.f32 %v710, %v726
        %v741 = vadd.f32 %v711, %v726
        %v742 = vadd.f32 %v720, %v726
        %v743 = vadd.f32 %v721, %v726
        %v744 = vld [vmem:[%s7] sm:$0xff]
        %v745 = vld [vmem:[%s7 + $0x8] sm:$0xff]
        %v746 = vld [vmem:[%s7 + $0x10] sm:$0xff]
        %v747 = vld [vmem:[%s7 + $0x18] sm:$0xff]
        %v748 = vld [vmem:[%s8] sm:$0x1]
        %v750 = vlaneseq
        %v751 = vshrl.u32 %v750, 7
        %v752 = vsub.s32 0, %v751
        %v753 = vrot.slane %v748, %v752
        %vm755 = vcmask 261120
        %v757 = vsel %vm755, %v728, 0
        %v760 = vsel %vm755, %v729, 0
        %v763 = vsel %vm755, %v730, 0
        %v766 = vsel %vm755, %v731, 0
        %v769 = vsel %vm755, %v732, 0
        %v772 = vsel %vm755, %v733, 0
        %v775 = vsel %vm755, %v734, 0
        %v778 = vsel %vm755, %v735, 0
        %v781 = vsel %vm755, %v736, 0
        %v784 = vsel %vm755, %v737, 0
        %v787 = vsel %vm755, %v738, 0
        %v790 = vsel %vm755, %v739, 0
        %v793 = vsel %vm755, %v740, 0
        %v796 = vsel %vm755, %v741, 0
        %v799 = vsel %vm755, %v742, 0
        %v802 = vsel %vm755, %v743, 0
        %804 = vmatprep.subr.mxu0 0.0
        %805 = vmatpush1.msra.mxu0 0.0
        %806 = vmatprep.subr.mxu0 0.0
        %807 = vmatpush1.msra.mxu0 0.0
        %808 = vmatprep.subr.mxu0 0.0
        %809 = vmatpush1.msra.mxu0 0.0
        %810 = vmatprep.subr.mxu0 0.0
        %811 = vmatpush1.msra.mxu0 0.0
        %812 = vmatprep.subr.mxu0 0.0
        %813 = vmatpush1.msra.mxu0 0.0
        %814 = vmatprep.subr.mxu0 0.0
        %815 = vmatpush1.msra.mxu0 0.0
        %816 = vmatprep.subr.mxu0 0.0
        %817 = vmatpush1.msra.mxu0 0.0
        %818 = vmatprep.subr.mxu0 0.0
        %819 = vmatpush1.msra.mxu0 0.0
        %820 = vmatprep.subr.mxu0 0.0
        %821 = vmatpush1.msra.mxu0 0.0
        %822 = vmatprep.subr.mxu0 0.0
        %823 = vmatpush1.msra.mxu0 0.0
        %824 = vmatprep.subr.mxu0 0.0
        %825 = vmatpush1.msra.mxu0 0.0
        %826 = vmatprep.subr.mxu0 0.0
        %827 = vmatpush1.msra.mxu0 0.0
        %828 = vmatprep.subr.mxu0 0.0
        %829 = vmatpush1.msra.mxu0 %v747
        %830 = vmatprep.subr.mxu0 0.0
        %831 = vmatpush1.msra.mxu0 %v746
        %832 = vmatprep.subr.mxu0 0.0
        %833 = vmatpush1.msra.mxu0 %v745
        %834 = vmatprep.subr.mxu0 0.0
        %835 = vmatpush1.msra.mxu0 %v744
        %836 = vmatprep.subr.mxu0 0.0
        %837 = vmatpush2.msra.mxu0 0.0
        %838 = vmatprep.subr.mxu0 0.0
        %839 = vmatpush2.msra.mxu0 0.0
        %840 = vmatprep.subr.mxu0 0.0
        %841 = vmatpush2.msra.mxu0 0.0
        %842 = vmatprep.subr.mxu0 0.0
        %843 = vmatpush2.msra.mxu0 0.0
        %844 = vmatprep.subr.mxu0 0.0
        %845 = vmatpush2.msra.mxu0 0.0
        %846 = vmatprep.subr.mxu0 0.0
        %847 = vmatpush2.msra.mxu0 0.0
        %848 = vmatprep.subr.mxu0 0.0
        %849 = vmatpush2.msra.mxu0 0.0
        %850 = vmatprep.subr.mxu0 0.0
        %851 = vmatpush2.msra.mxu0 0.0
        %852 = vmatprep.subr.mxu0 0.0
        %853 = vmatpush2.msra.mxu0 0.0
        %854 = vmatprep.subr.mxu0 0.0
        %855 = vmatpush2.msra.mxu0 0.0
        %856 = vmatprep.subr.mxu0 0.0
        %857 = vmatpush2.msra.mxu0 0.0
        %858 = vmatprep.subr.mxu0 0.0
        %859 = vmatpush2.msra.mxu0 0.0
        %860 = vmatprep.subr.mxu0 0.0
        %861 = vmatpush2.msra.mxu0 0.0
        %862 = vmatprep.subr.mxu0 0.0
        %863 = vmatpush2.msra.mxu0 0.0
        %864 = vmatprep.subr.mxu0 0.0
        %865 = vmatpush2.msra.mxu0 0.0
        %866 = vmatprep.subr.mxu0 0.0
        %867 = vmatpush2.msra.mxu0 0.0
        %868 = vmatprep.mubr.f32.mxu0 0.0
        %869 = vmatmul.mubr.f32.gmra.mxu0 %v757
        %v870 = vpop.f32.mrf.mxu0
        %v871 = vadd.f32 %v753, %v870
        %v872 = vpop.f32.mrf.mxu0
        %873 = vmatprep.mubr.f32.mxu0 0.0
        %874 = vmatmul.mubr.f32.gmra.mxu0 %v760
        %v875 = vpop.f32.mrf.mxu0
        %v876 = vadd.f32 %v753, %v875
        %v877 = vpop.f32.mrf.mxu0
        %878 = vmatprep.mubr.f32.mxu0 0.0
        %879 = vmatmul.mubr.f32.gmra.mxu0 %v763
        %v880 = vpop.f32.mrf.mxu0
        %v881 = vadd.f32 %v753, %v880
        %v882 = vpop.f32.mrf.mxu0
        %883 = vmatprep.mubr.f32.mxu0 0.0
        %884 = vmatmul.mubr.f32.gmra.mxu0 %v766
        %v885 = vpop.f32.mrf.mxu0
        %v886 = vadd.f32 %v753, %v885
        %v887 = vpop.f32.mrf.mxu0
        %888 = vmatprep.mubr.f32.mxu0 0.0
        %889 = vmatmul.mubr.f32.gmra.mxu0 %v769
        %v890 = vpop.f32.mrf.mxu0
        %v891 = vadd.f32 %v753, %v890
        %v892 = vpop.f32.mrf.mxu0
        %893 = vmatprep.mubr.f32.mxu0 0.0
        %894 = vmatmul.mubr.f32.gmra.mxu0 %v772
        %v895 = vpop.f32.mrf.mxu0
        %v896 = vadd.f32 %v753, %v895
        %v897 = vpop.f32.mrf.mxu0
        %898 = vmatprep.mubr.f32.mxu0 0.0
        %899 = vmatmul.mubr.f32.gmra.mxu0 %v775
        %v900 = vpop.f32.mrf.mxu0
        %v901 = vadd.f32 %v753, %v900
        %v902 = vpop.f32.mrf.mxu0
        %903 = vmatprep.mubr.f32.mxu0 0.0
        %904 = vmatmul.mubr.f32.gmra.mxu0 %v778
        %v905 = vpop.f32.mrf.mxu0
        %v906 = vadd.f32 %v753, %v905
        %v907 = vpop.f32.mrf.mxu0
        %908 = vmatprep.mubr.f32.mxu0 0.0
        %909 = vmatmul.mubr.f32.gmra.mxu0 %v781
        %v910 = vpop.f32.mrf.mxu0
        %v911 = vadd.f32 %v753, %v910
        %v912 = vpop.f32.mrf.mxu0
        %913 = vmatprep.mubr.f32.mxu0 0.0
        %914 = vmatmul.mubr.f32.gmra.mxu0 %v784
        %v915 = vpop.f32.mrf.mxu0
        %v916 = vadd.f32 %v753, %v915
        %v917 = vpop.f32.mrf.mxu0
        %918 = vmatprep.mubr.f32.mxu0 0.0
        %919 = vmatmul.mubr.f32.gmra.mxu0 %v787
        %v920 = vpop.f32.mrf.mxu0
        %v921 = vadd.f32 %v753, %v920
        %v922 = vpop.f32.mrf.mxu0
        %923 = vmatprep.mubr.f32.mxu0 0.0
        %924 = vmatmul.mubr.f32.gmra.mxu0 %v790
        %v925 = vpop.f32.mrf.mxu0
        %v926 = vadd.f32 %v753, %v925
        %v927 = vpop.f32.mrf.mxu0
        %928 = vmatprep.mubr.f32.mxu0 0.0
        %929 = vmatmul.mubr.f32.gmra.mxu0 %v793
        %v930 = vpop.f32.mrf.mxu0
        %v931 = vadd.f32 %v753, %v930
        %v932 = vpop.f32.mrf.mxu0
        %933 = vmatprep.mubr.f32.mxu0 0.0
        %934 = vmatmul.mubr.f32.gmra.mxu0 %v796
        %v935 = vpop.f32.mrf.mxu0
        %v936 = vadd.f32 %v753, %v935
        %v937 = vpop.f32.mrf.mxu0
        %938 = vmatprep.mubr.f32.mxu0 0.0
        %939 = vmatmul.mubr.f32.gmra.mxu0 %v799
        %v940 = vpop.f32.mrf.mxu0
        %v941 = vadd.f32 %v753, %v940
        %v942 = vpop.f32.mrf.mxu0
        %943 = vmatprep.mubr.f32.mxu0 0.0
        %944 = vmatmul.mubr.f32.gmra.mxu0 %v802
        %v945 = vpop.f32.mrf.mxu0
        %v946 = vadd.f32 %v753, %v945
        %v947 = vpop.f32.mrf.mxu0
        %948 = vdwg.mxu0
        %v949 = vadd.f32 %v871, %v728
        %v950 = vadd.f32 %v876, %v729
        %v951 = vadd.f32 %v881, %v730
        %v952 = vadd.f32 %v886, %v731
        %v953 = vadd.f32 %v891, %v732
        %v954 = vadd.f32 %v896, %v733
        %v955 = vadd.f32 %v901, %v734
        %v956 = vadd.f32 %v906, %v735
        %v957 = vadd.f32 %v911, %v736
        %v958 = vadd.f32 %v916, %v737
        %v959 = vadd.f32 %v921, %v738
        %v960 = vadd.f32 %v926, %v739
        %v961 = vadd.f32 %v931, %v740
        %v962 = vadd.f32 %v936, %v741
        %v963 = vadd.f32 %v941, %v742
        %v964 = vadd.f32 %v946, %v743
        %v965 = vtanh.pop %v949
        %v966 = vtanh.pop %v950
        %v967 = vtanh.pop %v951
        %v968 = vtanh.pop %v952
        %v969 = vtanh.pop %v953
        %v970 = vtanh.pop %v954
        %v971 = vtanh.pop %v955
        %v972 = vtanh.pop %v956
        %v973 = vtanh.pop %v957
        %v974 = vtanh.pop %v958
        %v975 = vtanh.pop %v959
        %v976 = vtanh.pop %v960
        %v977 = vtanh.pop %v961
        %v978 = vtanh.pop %v962
        %v979 = vtanh.pop %v963
        %v980 = vtanh.pop %v964
        %v982 = vsel %vm524, %v514, 0
        %v985 = vsel %vm524, %v515, 0
        %987 = vmatprep.subr.mxu0 0.0
        %988 = vmatpush1.msra.mxu0 0.0
        %989 = vmatprep.subr.mxu0 0.0
        %990 = vmatpush1.msra.mxu0 0.0
        %991 = vmatprep.subr.mxu0 0.0
        %992 = vmatpush1.msra.mxu0 0.0
        %993 = vmatprep.subr.mxu0 0.0
        %994 = vmatpush1.msra.mxu0 0.0
        %995 = vmatprep.subr.mxu0 0.0
        %996 = vmatpush1.msra.mxu0 0.0
        %997 = vmatprep.subr.mxu0 0.0
        %998 = vmatpush1.msra.mxu0 0.0
        %999 = vmatprep.subr.mxu0 0.0
        %1000 = vmatpush1.msra.mxu0 0.0
        %1001 = vmatprep.subr.mxu0 0.0
        %1002 = vmatpush1.msra.mxu0 0.0
        %1003 = vmatprep.subr.mxu0 0.0
        %1004 = vmatpush1.msra.mxu0 0.0
        %1005 = vmatprep.subr.mxu0 0.0
        %1006 = vmatpush1.msra.mxu0 0.0
        %1007 = vmatprep.subr.mxu0 0.0
        %1008 = vmatpush1.msra.mxu0 0.0
        %1009 = vmatprep.subr.mxu0 0.0
        %1010 = vmatpush1.msra.mxu0 0.0
        %1011 = vmatprep.subr.mxu0 0.0
        %1012 = vmatpush1.msra.mxu0 0.0
        %1013 = vmatprep.subr.mxu0 0.0
        %1014 = vmatpush1.msra.mxu0 0.0
        %1015 = vmatprep.subr.mxu0 0.0
        %1016 = vmatpush1.msra.mxu0 %v966
        %1017 = vmatprep.subr.mxu0 0.0
        %1018 = vmatpush1.msra.mxu0 %v965
        %1019 = vmatprep.subr.mxu0 0.0
        %1020 = vmatpush2.msra.mxu0 0.0
        %1021 = vmatprep.subr.mxu0 0.0
        %1022 = vmatpush2.msra.mxu0 0.0
        %1023 = vmatprep.subr.mxu0 0.0
        %1024 = vmatpush2.msra.mxu0 0.0
        %1025 = vmatprep.subr.mxu0 0.0
        %1026 = vmatpush2.msra.mxu0 0.0
        %1027 = vmatprep.subr.mxu0 0.0
        %1028 = vmatpush2.msra.mxu0 0.0
        %1029 = vmatprep.subr.mxu0 0.0
        %1030 = vmatpush2.msra.mxu0 0.0
        %1031 = vmatprep.subr.mxu0 0.0
        %1032 = vmatpush2.msra.mxu0 0.0
        %1033 = vmatprep.subr.mxu0 0.0
        %1034 = vmatpush2.msra.mxu0 0.0
        %1035 = vmatprep.subr.mxu0 0.0
        %1036 = vmatpush2.msra.mxu0 0.0
        %1037 = vmatprep.subr.mxu0 0.0
        %1038 = vmatpush2.msra.mxu0 0.0
        %1039 = vmatprep.subr.mxu0 0.0
        %1040 = vmatpush2.msra.mxu0 0.0
        %1041 = vmatprep.subr.mxu0 0.0
        %1042 = vmatpush2.msra.mxu0 0.0
        %1043 = vmatprep.subr.mxu0 0.0
        %1044 = vmatpush2.msra.mxu0 0.0
        %1045 = vmatprep.subr.mxu0 0.0
        %1046 = vmatpush2.msra.mxu0 0.0
        %1047 = vmatprep.subr.mxu0 0.0
        %1048 = vmatpush2.msra.mxu0 0.0
        %1049 = vmatprep.subr.mxu0 0.0
        %1050 = vmatpush2.msra.mxu0 0.0
        %1051 = vmatprep.mubr.f32.mxu0 0.0
        %1052 = vmatmul.mubr.f32.gmra.mxu0 %v982
        %v1053 = vpop.f32.mrf.mxu0
        %v1054 = vadd.f32 0.0, %v1053
        %v1055 = vpop.f32.mrf.mxu0
        %1056 = vmatprep.mubr.f32.mxu0 0.0
        %1057 = vmatmul.mubr.f32.gmra.mxu0 %v985
        %v1058 = vpop.f32.mrf.mxu0
        %v1059 = vadd.f32 0.0, %v1058
        %v1060 = vpop.f32.mrf.mxu0
        %1061 = vdwg.mxu0
        %1063 = vset.pattern.permute.xlu0 0
        %1064 = vperm.xlu0 %1063, %v520
        %v1065 = vpop.permute.xlu0 %1064
        %1068 = vset.pattern.permute.xlu0 0
        %1069 = vperm.xlu0 %1068, %v521
        %v1070 = vpop.permute.xlu0 %1069
        %v1072 = vrcp.pop %v1065
        %v1073 = vmul.f32 %v1054, %v1072
        %v1074 = vrcp.pop %v1070
        %v1075 = vmul.f32 %v1059, %v1074
        %1076 = vmatprep.subr.mxu0 0.0
        %1077 = vmatpush1.msra.mxu0 0.0
        %1078 = vmatprep.subr.mxu0 0.0
        %1079 = vmatpush1.msra.mxu0 0.0
        %1080 = vmatprep.subr.mxu0 0.0
        %1081 = vmatpush1.msra.mxu0 0.0
        %1082 = vmatprep.subr.mxu0 0.0
        %1083 = vmatpush1.msra.mxu0 0.0
        %1084 = vmatprep.subr.mxu0 0.0
        %1085 = vmatpush1.msra.mxu0 0.0
        %1086 = vmatprep.subr.mxu0 0.0
        %1087 = vmatpush1.msra.mxu0 0.0
        %1088 = vmatprep.subr.mxu0 0.0
        %1089 = vmatpush1.msra.mxu0 0.0
        %1090 = vmatprep.subr.mxu0 0.0
        %1091 = vmatpush1.msra.mxu0 0.0
        %1092 = vmatprep.subr.mxu0 0.0
        %1093 = vmatpush1.msra.mxu0 0.0
        %1094 = vmatprep.subr.mxu0 0.0
        %1095 = vmatpush1.msra.mxu0 0.0
        %1096 = vmatprep.subr.mxu0 0.0
        %1097 = vmatpush1.msra.mxu0 0.0
        %1098 = vmatprep.subr.mxu0 0.0
        %1099 = vmatpush1.msra.mxu0 0.0
        %1100 = vmatprep.subr.mxu0 0.0
        %1101 = vmatpush1.msra.mxu0 0.0
        %1102 = vmatprep.subr.mxu0 0.0
        %1103 = vmatpush1.msra.mxu0 0.0
        %1104 = vmatprep.subr.mxu0 0.0
        %1105 = vmatpush1.msra.mxu0 %v968
        %1106 = vmatprep.subr.mxu0 0.0
        %1107 = vmatpush1.msra.mxu0 %v967
        %1108 = vmatprep.subr.mxu0 0.0
        %1109 = vmatpush2.msra.mxu0 0.0
        %1110 = vmatprep.subr.mxu0 0.0
        %1111 = vmatpush2.msra.mxu0 0.0
        %1112 = vmatprep.subr.mxu0 0.0
        %1113 = vmatpush2.msra.mxu0 0.0
        %1114 = vmatprep.subr.mxu0 0.0
        %1115 = vmatpush2.msra.mxu0 0.0
        %1116 = vmatprep.subr.mxu0 0.0
        %1117 = vmatpush2.msra.mxu0 0.0
        %1118 = vmatprep.subr.mxu0 0.0
        %1119 = vmatpush2.msra.mxu0 0.0
        %1120 = vmatprep.subr.mxu0 0.0
        %1121 = vmatpush2.msra.mxu0 0.0
        %1122 = vmatprep.subr.mxu0 0.0
        %1123 = vmatpush2.msra.mxu0 0.0
        %1124 = vmatprep.subr.mxu0 0.0
        %1125 = vmatpush2.msra.mxu0 0.0
        %1126 = vmatprep.subr.mxu0 0.0
        %1127 = vmatpush2.msra.mxu0 0.0
        %1128 = vmatprep.subr.mxu0 0.0
        %1129 = vmatpush2.msra.mxu0 0.0
        %1130 = vmatprep.subr.mxu0 0.0
        %1131 = vmatpush2.msra.mxu0 0.0
        %1132 = vmatprep.subr.mxu0 0.0
        %1133 = vmatpush2.msra.mxu0 0.0
        %1134 = vmatprep.subr.mxu0 0.0
        %1135 = vmatpush2.msra.mxu0 0.0
        %1136 = vmatprep.subr.mxu0 0.0
        %1137 = vmatpush2.msra.mxu0 0.0
        %1138 = vmatprep.subr.mxu0 0.0
        %1139 = vmatpush2.msra.mxu0 0.0
        %1140 = vmatprep.mubr.f32.mxu0 0.0
        %1141 = vmatmul.mubr.f32.gmra.mxu0 %v982
        %v1142 = vpop.f32.mrf.mxu0
        %v1143 = vadd.f32 0.0, %v1142
        %v1144 = vpop.f32.mrf.mxu0
        %1145 = vmatprep.mubr.f32.mxu0 0.0
        %1146 = vmatmul.mubr.f32.gmra.mxu0 %v985
        %v1147 = vpop.f32.mrf.mxu0
        %v1148 = vadd.f32 0.0, %v1147
        %v1149 = vpop.f32.mrf.mxu0
        %1150 = vdwg.mxu0
        %v1151 = vmul.f32 %v1143, %v1072
        %v1152 = vmul.f32 %v1148, %v1074
        %1153 = vmatprep.subr.mxu0 0.0
        %1154 = vmatpush1.msra.mxu0 0.0
        %1155 = vmatprep.subr.mxu0 0.0
        %1156 = vmatpush1.msra.mxu0 0.0
        %1157 = vmatprep.subr.mxu0 0.0
        %1158 = vmatpush1.msra.mxu0 0.0
        %1159 = vmatprep.subr.mxu0 0.0
        %1160 = vmatpush1.msra.mxu0 0.0
        %1161 = vmatprep.subr.mxu0 0.0
        %1162 = vmatpush1.msra.mxu0 0.0
        %1163 = vmatprep.subr.mxu0 0.0
        %1164 = vmatpush1.msra.mxu0 0.0
        %1165 = vmatprep.subr.mxu0 0.0
        %1166 = vmatpush1.msra.mxu0 0.0
        %1167 = vmatprep.subr.mxu0 0.0
        %1168 = vmatpush1.msra.mxu0 0.0
        %1169 = vmatprep.subr.mxu0 0.0
        %1170 = vmatpush1.msra.mxu0 0.0
        %1171 = vmatprep.subr.mxu0 0.0
        %1172 = vmatpush1.msra.mxu0 0.0
        %1173 = vmatprep.subr.mxu0 0.0
        %1174 = vmatpush1.msra.mxu0 0.0
        %1175 = vmatprep.subr.mxu0 0.0
        %1176 = vmatpush1.msra.mxu0 0.0
        %1177 = vmatprep.subr.mxu0 0.0
        %1178 = vmatpush1.msra.mxu0 0.0
        %1179 = vmatprep.subr.mxu0 0.0
        %1180 = vmatpush1.msra.mxu0 0.0
        %1181 = vmatprep.subr.mxu0 0.0
        %1182 = vmatpush1.msra.mxu0 %v970
        %1183 = vmatprep.subr.mxu0 0.0
        %1184 = vmatpush1.msra.mxu0 %v969
        %1185 = vmatprep.subr.mxu0 0.0
        %1186 = vmatpush2.msra.mxu0 0.0
        %1187 = vmatprep.subr.mxu0 0.0
        %1188 = vmatpush2.msra.mxu0 0.0
        %1189 = vmatprep.subr.mxu0 0.0
        %1190 = vmatpush2.msra.mxu0 0.0
        %1191 = vmatprep.subr.mxu0 0.0
        %1192 = vmatpush2.msra.mxu0 0.0
        %1193 = vmatprep.subr.mxu0 0.0
        %1194 = vmatpush2.msra.mxu0 0.0
        %1195 = vmatprep.subr.mxu0 0.0
        %1196 = vmatpush2.msra.mxu0 0.0
        %1197 = vmatprep.subr.mxu0 0.0
        %1198 = vmatpush2.msra.mxu0 0.0
        %1199 = vmatprep.subr.mxu0 0.0
        %1200 = vmatpush2.msra.mxu0 0.0
        %1201 = vmatprep.subr.mxu0 0.0
        %1202 = vmatpush2.msra.mxu0 0.0
        %1203 = vmatprep.subr.mxu0 0.0
        %1204 = vmatpush2.msra.mxu0 0.0
        %1205 = vmatprep.subr.mxu0 0.0
        %1206 = vmatpush2.msra.mxu0 0.0
        %1207 = vmatprep.subr.mxu0 0.0
        %1208 = vmatpush2.msra.mxu0 0.0
        %1209 = vmatprep.subr.mxu0 0.0
        %1210 = vmatpush2.msra.mxu0 0.0
        %1211 = vmatprep.subr.mxu0 0.0
        %1212 = vmatpush2.msra.mxu0 0.0
        %1213 = vmatprep.subr.mxu0 0.0
        %1214 = vmatpush2.msra.mxu0 0.0
        %1215 = vmatprep.subr.mxu0 0.0
        %1216 = vmatpush2.msra.mxu0 0.0
        %1217 = vmatprep.mubr.f32.mxu0 0.0
        %1218 = vmatmul.mubr.f32.gmra.mxu0 %v982
        %v1219 = vpop.f32.mrf.mxu0
        %v1220 = vadd.f32 0.0, %v1219
        %v1221 = vpop.f32.mrf.mxu0
        %1222 = vmatprep.mubr.f32.mxu0 0.0
        %1223 = vmatmul.mubr.f32.gmra.mxu0 %v985
        %v1224 = vpop.f32.mrf.mxu0
        %v1225 = vadd.f32 0.0, %v1224
        %v1226 = vpop.f32.mrf.mxu0
        %1227 = vdwg.mxu0
        %v1228 = vmul.f32 %v1220, %v1072
        %v1229 = vmul.f32 %v1225, %v1074
        %1230 = vmatprep.subr.mxu0 0.0
        %1231 = vmatpush1.msra.mxu0 0.0
        %1232 = vmatprep.subr.mxu0 0.0
        %1233 = vmatpush1.msra.mxu0 0.0
        %1234 = vmatprep.subr.mxu0 0.0
        %1235 = vmatpush1.msra.mxu0 0.0
        %1236 = vmatprep.subr.mxu0 0.0
        %1237 = vmatpush1.msra.mxu0 0.0
        %1238 = vmatprep.subr.mxu0 0.0
        %1239 = vmatpush1.msra.mxu0 0.0
        %1240 = vmatprep.subr.mxu0 0.0
        %1241 = vmatpush1.msra.mxu0 0.0
        %1242 = vmatprep.subr.mxu0 0.0
        %1243 = vmatpush1.msra.mxu0 0.0
        %1244 = vmatprep.subr.mxu0 0.0
        %1245 = vmatpush1.msra.mxu0 0.0
        %1246 = vmatprep.subr.mxu0 0.0
        %1247 = vmatpush1.msra.mxu0 0.0
        %1248 = vmatprep.subr.mxu0 0.0
        %1249 = vmatpush1.msra.mxu0 0.0
        %1250 = vmatprep.subr.mxu0 0.0
        %1251 = vmatpush1.msra.mxu0 0.0
        %1252 = vmatprep.subr.mxu0 0.0
        %1253 = vmatpush1.msra.mxu0 0.0
        %1254 = vmatprep.subr.mxu0 0.0
        %1255 = vmatpush1.msra.mxu0 0.0
        %1256 = vmatprep.subr.mxu0 0.0
        %1257 = vmatpush1.msra.mxu0 0.0
        %1258 = vmatprep.subr.mxu0 0.0
        %1259 = vmatpush1.msra.mxu0 %v972
        %1260 = vmatprep.subr.mxu0 0.0
        %1261 = vmatpush1.msra.mxu0 %v971
        %1262 = vmatprep.subr.mxu0 0.0
        %1263 = vmatpush2.msra.mxu0 0.0
        %1264 = vmatprep.subr.mxu0 0.0
        %1265 = vmatpush2.msra.mxu0 0.0
        %1266 = vmatprep.subr.mxu0 0.0
        %1267 = vmatpush2.msra.mxu0 0.0
        %1268 = vmatprep.subr.mxu0 0.0
        %1269 = vmatpush2.msra.mxu0 0.0
        %1270 = vmatprep.subr.mxu0 0.0
        %1271 = vmatpush2.msra.mxu0 0.0
        %1272 = vmatprep.subr.mxu0 0.0
        %1273 = vmatpush2.msra.mxu0 0.0
        %1274 = vmatprep.subr.mxu0 0.0
        %1275 = vmatpush2.msra.mxu0 0.0
        %1276 = vmatprep.subr.mxu0 0.0
        %1277 = vmatpush2.msra.mxu0 0.0
        %1278 = vmatprep.subr.mxu0 0.0
        %1279 = vmatpush2.msra.mxu0 0.0
        %1280 = vmatprep.subr.mxu0 0.0
        %1281 = vmatpush2.msra.mxu0 0.0
        %1282 = vmatprep.subr.mxu0 0.0
        %1283 = vmatpush2.msra.mxu0 0.0
        %1284 = vmatprep.subr.mxu0 0.0
        %1285 = vmatpush2.msra.mxu0 0.0
        %1286 = vmatprep.subr.mxu0 0.0
        %1287 = vmatpush2.msra.mxu0 0.0
        %1288 = vmatprep.subr.mxu0 0.0
        %1289 = vmatpush2.msra.mxu0 0.0
        %1290 = vmatprep.subr.mxu0 0.0
        %1291 = vmatpush2.msra.mxu0 0.0
        %1292 = vmatprep.subr.mxu0 0.0
        %1293 = vmatpush2.msra.mxu0 0.0
        %1294 = vmatprep.mubr.f32.mxu0 0.0
        %1295 = vmatmul.mubr.f32.gmra.mxu0 %v982
        %v1296 = vpop.f32.mrf.mxu0
        %v1297 = vadd.f32 0.0, %v1296
        %v1298 = vpop.f32.mrf.mxu0
        %1299 = vmatprep.mubr.f32.mxu0 0.0
        %1300 = vmatmul.mubr.f32.gmra.mxu0 %v985
        %v1301 = vpop.f32.mrf.mxu0
        %v1302 = vadd.f32 0.0, %v1301
        %v1303 = vpop.f32.mrf.mxu0
        %1304 = vdwg.mxu0
        %v1305 = vmul.f32 %v1297, %v1072
        %v1306 = vmul.f32 %v1302, %v1074
        %1307 = vmatprep.subr.mxu0 0.0
        %1308 = vmatpush1.msra.mxu0 0.0
        %1309 = vmatprep.subr.mxu0 0.0
        %1310 = vmatpush1.msra.mxu0 0.0
        %1311 = vmatprep.subr.mxu0 0.0
        %1312 = vmatpush1.msra.mxu0 0.0
        %1313 = vmatprep.subr.mxu0 0.0
        %1314 = vmatpush1.msra.mxu0 0.0
        %1315 = vmatprep.subr.mxu0 0.0
        %1316 = vmatpush1.msra.mxu0 0.0
        %1317 = vmatprep.subr.mxu0 0.0
        %1318 = vmatpush1.msra.mxu0 0.0
        %1319 = vmatprep.subr.mxu0 0.0
        %1320 = vmatpush1.msra.mxu0 0.0
        %1321 = vmatprep.subr.mxu0 0.0
        %1322 = vmatpush1.msra.mxu0 0.0
        %1323 = vmatprep.subr.mxu0 0.0
        %1324 = vmatpush1.msra.mxu0 0.0
        %1325 = vmatprep.subr.mxu0 0.0
        %1326 = vmatpush1.msra.mxu0 0.0
        %1327 = vmatprep.subr.mxu0 0.0
        %1328 = vmatpush1.msra.mxu0 0.0
        %1329 = vmatprep.subr.mxu0 0.0
        %1330 = vmatpush1.msra.mxu0 0.0
        %1331 = vmatprep.subr.mxu0 0.0
        %1332 = vmatpush1.msra.mxu0 0.0
        %1333 = vmatprep.subr.mxu0 0.0
        %1334 = vmatpush1.msra.mxu0 0.0
        %1335 = vmatprep.subr.mxu0 0.0
        %1336 = vmatpush1.msra.mxu0 %v974
        %1337 = vmatprep.subr.mxu0 0.0
        %1338 = vmatpush1.msra.mxu0 %v973
        %1339 = vmatprep.subr.mxu0 0.0
        %1340 = vmatpush2.msra.mxu0 0.0
        %1341 = vmatprep.subr.mxu0 0.0
        %1342 = vmatpush2.msra.mxu0 0.0
        %1343 = vmatprep.subr.mxu0 0.0
        %1344 = vmatpush2.msra.mxu0 0.0
        %1345 = vmatprep.subr.mxu0 0.0
        %1346 = vmatpush2.msra.mxu0 0.0
        %1347 = vmatprep.subr.mxu0 0.0
        %1348 = vmatpush2.msra.mxu0 0.0
        %1349 = vmatprep.subr.mxu0 0.0
        %1350 = vmatpush2.msra.mxu0 0.0
        %1351 = vmatprep.subr.mxu0 0.0
        %1352 = vmatpush2.msra.mxu0 0.0
        %1353 = vmatprep.subr.mxu0 0.0
        %1354 = vmatpush2.msra.mxu0 0.0
        %1355 = vmatprep.subr.mxu0 0.0
        %1356 = vmatpush2.msra.mxu0 0.0
        %1357 = vmatprep.subr.mxu0 0.0
        %1358 = vmatpush2.msra.mxu0 0.0
        %1359 = vmatprep.subr.mxu0 0.0
        %1360 = vmatpush2.msra.mxu0 0.0
        %1361 = vmatprep.subr.mxu0 0.0
        %1362 = vmatpush2.msra.mxu0 0.0
        %1363 = vmatprep.subr.mxu0 0.0
        %1364 = vmatpush2.msra.mxu0 0.0
        %1365 = vmatprep.subr.mxu0 0.0
        %1366 = vmatpush2.msra.mxu0 0.0
        %1367 = vmatprep.subr.mxu0 0.0
        %1368 = vmatpush2.msra.mxu0 0.0
        %1369 = vmatprep.subr.mxu0 0.0
        %1370 = vmatpush2.msra.mxu0 0.0
        %1371 = vmatprep.mubr.f32.mxu0 0.0
        %1372 = vmatmul.mubr.f32.gmra.mxu0 %v982
        %v1373 = vpop.f32.mrf.mxu0
        %v1374 = vadd.f32 0.0, %v1373
        %v1375 = vpop.f32.mrf.mxu0
        %1376 = vmatprep.mubr.f32.mxu0 0.0
        %1377 = vmatmul.mubr.f32.gmra.mxu0 %v985
        %v1378 = vpop.f32.mrf.mxu0
        %v1379 = vadd.f32 0.0, %v1378
        %v1380 = vpop.f32.mrf.mxu0
        %1381 = vdwg.mxu0
        %v1382 = vmul.f32 %v1374, %v1072
        %v1383 = vmul.f32 %v1379, %v1074
        %1384 = vmatprep.subr.mxu0 0.0
        %1385 = vmatpush1.msra.mxu0 0.0
        %1386 = vmatprep.subr.mxu0 0.0
        %1387 = vmatpush1.msra.mxu0 0.0
        %1388 = vmatprep.subr.mxu0 0.0
        %1389 = vmatpush1.msra.mxu0 0.0
        %1390 = vmatprep.subr.mxu0 0.0
        %1391 = vmatpush1.msra.mxu0 0.0
        %1392 = vmatprep.subr.mxu0 0.0
        %1393 = vmatpush1.msra.mxu0 0.0
        %1394 = vmatprep.subr.mxu0 0.0
        %1395 = vmatpush1.msra.mxu0 0.0
        %1396 = vmatprep.subr.mxu0 0.0
        %1397 = vmatpush1.msra.mxu0 0.0
        %1398 = vmatprep.subr.mxu0 0.0
        %1399 = vmatpush1.msra.mxu0 0.0
        %1400 = vmatprep.subr.mxu0 0.0
        %1401 = vmatpush1.msra.mxu0 0.0
        %1402 = vmatprep.subr.mxu0 0.0
        %1403 = vmatpush1.msra.mxu0 0.0
        %1404 = vmatprep.subr.mxu0 0.0
        %1405 = vmatpush1.msra.mxu0 0.0
        %1406 = vmatprep.subr.mxu0 0.0
        %1407 = vmatpush1.msra.mxu0 0.0
        %1408 = vmatprep.subr.mxu0 0.0
        %1409 = vmatpush1.msra.mxu0 0.0
        %1410 = vmatprep.subr.mxu0 0.0
        %1411 = vmatpush1.msra.mxu0 0.0
        %1412 = vmatprep.subr.mxu0 0.0
        %1413 = vmatpush1.msra.mxu0 %v976
        %1414 = vmatprep.subr.mxu0 0.0
        %1415 = vmatpush1.msra.mxu0 %v975
        %1416 = vmatprep.subr.mxu0 0.0
        %1417 = vmatpush2.msra.mxu0 0.0
        %1418 = vmatprep.subr.mxu0 0.0
        %1419 = vmatpush2.msra.mxu0 0.0
        %1420 = vmatprep.subr.mxu0 0.0
        %1421 = vmatpush2.msra.mxu0 0.0
        %1422 = vmatprep.subr.mxu0 0.0
        %1423 = vmatpush2.msra.mxu0 0.0
        %1424 = vmatprep.subr.mxu0 0.0
        %1425 = vmatpush2.msra.mxu0 0.0
        %1426 = vmatprep.subr.mxu0 0.0
        %1427 = vmatpush2.msra.mxu0 0.0
        %1428 = vmatprep.subr.mxu0 0.0
        %1429 = vmatpush2.msra.mxu0 0.0
        %1430 = vmatprep.subr.mxu0 0.0
        %1431 = vmatpush2.msra.mxu0 0.0
        %1432 = vmatprep.subr.mxu0 0.0
        %1433 = vmatpush2.msra.mxu0 0.0
        %1434 = vmatprep.subr.mxu0 0.0
        %1435 = vmatpush2.msra.mxu0 0.0
        %1436 = vmatprep.subr.mxu0 0.0
        %1437 = vmatpush2.msra.mxu0 0.0
        %1438 = vmatprep.subr.mxu0 0.0
        %1439 = vmatpush2.msra.mxu0 0.0
        %1440 = vmatprep.subr.mxu0 0.0
        %1441 = vmatpush2.msra.mxu0 0.0
        %1442 = vmatprep.subr.mxu0 0.0
        %1443 = vmatpush2.msra.mxu0 0.0
        %1444 = vmatprep.subr.mxu0 0.0
        %1445 = vmatpush2.msra.mxu0 0.0
        %1446 = vmatprep.subr.mxu0 0.0
        %1447 = vmatpush2.msra.mxu0 0.0
        %1448 = vmatprep.mubr.f32.mxu0 0.0
        %1449 = vmatmul.mubr.f32.gmra.mxu0 %v982
        %v1450 = vpop.f32.mrf.mxu0
        %v1451 = vadd.f32 0.0, %v1450
        %v1452 = vpop.f32.mrf.mxu0
        %1453 = vmatprep.mubr.f32.mxu0 0.0
        %1454 = vmatmul.mubr.f32.gmra.mxu0 %v985
        %v1455 = vpop.f32.mrf.mxu0
        %v1456 = vadd.f32 0.0, %v1455
        %v1457 = vpop.f32.mrf.mxu0
        %1458 = vdwg.mxu0
        %v1459 = vmul.f32 %v1451, %v1072
        %v1460 = vmul.f32 %v1456, %v1074
        %1461 = vmatprep.subr.mxu0 0.0
        %1462 = vmatpush1.msra.mxu0 0.0
        %1463 = vmatprep.subr.mxu0 0.0
        %1464 = vmatpush1.msra.mxu0 0.0
        %1465 = vmatprep.subr.mxu0 0.0
        %1466 = vmatpush1.msra.mxu0 0.0
        %1467 = vmatprep.subr.mxu0 0.0
        %1468 = vmatpush1.msra.mxu0 0.0
        %1469 = vmatprep.subr.mxu0 0.0
        %1470 = vmatpush1.msra.mxu0 0.0
        %1471 = vmatprep.subr.mxu0 0.0
        %1472 = vmatpush1.msra.mxu0 0.0
        %1473 = vmatprep.subr.mxu0 0.0
        %1474 = vmatpush1.msra.mxu0 0.0
        %1475 = vmatprep.subr.mxu0 0.0
        %1476 = vmatpush1.msra.mxu0 0.0
        %1477 = vmatprep.subr.mxu0 0.0
        %1478 = vmatpush1.msra.mxu0 0.0
        %1479 = vmatprep.subr.mxu0 0.0
        %1480 = vmatpush1.msra.mxu0 0.0
        %1481 = vmatprep.subr.mxu0 0.0
        %1482 = vmatpush1.msra.mxu0 0.0
        %1483 = vmatprep.subr.mxu0 0.0
        %1484 = vmatpush1.msra.mxu0 0.0
        %1485 = vmatprep.subr.mxu0 0.0
        %1486 = vmatpush1.msra.mxu0 0.0
        %1487 = vmatprep.subr.mxu0 0.0
        %1488 = vmatpush1.msra.mxu0 0.0
        %1489 = vmatprep.subr.mxu0 0.0
        %1490 = vmatpush1.msra.mxu0 %v978
        %1491 = vmatprep.subr.mxu0 0.0
        %1492 = vmatpush1.msra.mxu0 %v977
        %1493 = vmatprep.subr.mxu0 0.0
        %1494 = vmatpush2.msra.mxu0 0.0
        %1495 = vmatprep.subr.mxu0 0.0
        %1496 = vmatpush2.msra.mxu0 0.0
        %1497 = vmatprep.subr.mxu0 0.0
        %1498 = vmatpush2.msra.mxu0 0.0
        %1499 = vmatprep.subr.mxu0 0.0
        %1500 = vmatpush2.msra.mxu0 0.0
        %1501 = vmatprep.subr.mxu0 0.0
        %1502 = vmatpush2.msra.mxu0 0.0
        %1503 = vmatprep.subr.mxu0 0.0
        %1504 = vmatpush2.msra.mxu0 0.0
        %1505 = vmatprep.subr.mxu0 0.0
        %1506 = vmatpush2.msra.mxu0 0.0
        %1507 = vmatprep.subr.mxu0 0.0
        %1508 = vmatpush2.msra.mxu0 0.0
        %1509 = vmatprep.subr.mxu0 0.0
        %1510 = vmatpush2.msra.mxu0 0.0
        %1511 = vmatprep.subr.mxu0 0.0
        %1512 = vmatpush2.msra.mxu0 0.0
        %1513 = vmatprep.subr.mxu0 0.0
        %1514 = vmatpush2.msra.mxu0 0.0
        %1515 = vmatprep.subr.mxu0 0.0
        %1516 = vmatpush2.msra.mxu0 0.0
        %1517 = vmatprep.subr.mxu0 0.0
        %1518 = vmatpush2.msra.mxu0 0.0
        %1519 = vmatprep.subr.mxu0 0.0
        %1520 = vmatpush2.msra.mxu0 0.0
        %1521 = vmatprep.subr.mxu0 0.0
        %1522 = vmatpush2.msra.mxu0 0.0
        %1523 = vmatprep.subr.mxu0 0.0
        %1524 = vmatpush2.msra.mxu0 0.0
        %1525 = vmatprep.mubr.f32.mxu0 0.0
        %1526 = vmatmul.mubr.f32.gmra.mxu0 %v982
        %v1527 = vpop.f32.mrf.mxu0
        %v1528 = vadd.f32 0.0, %v1527
        %v1529 = vpop.f32.mrf.mxu0
        %1530 = vmatprep.mubr.f32.mxu0 0.0
        %1531 = vmatmul.mubr.f32.gmra.mxu0 %v985
        %v1532 = vpop.f32.mrf.mxu0
        %v1533 = vadd.f32 0.0, %v1532
        %v1534 = vpop.f32.mrf.mxu0
        %1535 = vdwg.mxu0
        %v1536 = vmul.f32 %v1528, %v1072
        %v1537 = vmul.f32 %v1533, %v1074
        %1538 = vmatprep.subr.mxu0 0.0
        %1539 = vmatpush1.msra.mxu0 0.0
        %1540 = vmatprep.subr.mxu0 0.0
        %1541 = vmatpush1.msra.mxu0 0.0
        %1542 = vmatprep.subr.mxu0 0.0
        %1543 = vmatpush1.msra.mxu0 0.0
        %1544 = vmatprep.subr.mxu0 0.0
        %1545 = vmatpush1.msra.mxu0 0.0
        %1546 = vmatprep.subr.mxu0 0.0
        %1547 = vmatpush1.msra.mxu0 0.0
        %1548 = vmatprep.subr.mxu0 0.0
        %1549 = vmatpush1.msra.mxu0 0.0
        %1550 = vmatprep.subr.mxu0 0.0
        %1551 = vmatpush1.msra.mxu0 0.0
        %1552 = vmatprep.subr.mxu0 0.0
        %1553 = vmatpush1.msra.mxu0 0.0
        %1554 = vmatprep.subr.mxu0 0.0
        %1555 = vmatpush1.msra.mxu0 0.0
        %1556 = vmatprep.subr.mxu0 0.0
        %1557 = vmatpush1.msra.mxu0 0.0
        %1558 = vmatprep.subr.mxu0 0.0
        %1559 = vmatpush1.msra.mxu0 0.0
        %1560 = vmatprep.subr.mxu0 0.0
        %1561 = vmatpush1.msra.mxu0 0.0
        %1562 = vmatprep.subr.mxu0 0.0
        %1563 = vmatpush1.msra.mxu0 0.0
        %1564 = vmatprep.subr.mxu0 0.0
        %1565 = vmatpush1.msra.mxu0 0.0
        %1566 = vmatprep.subr.mxu0 0.0
        %1567 = vmatpush1.msra.mxu0 %v980
        %1568 = vmatprep.subr.mxu0 0.0
        %1569 = vmatpush1.msra.mxu0 %v979
        %1570 = vmatprep.subr.mxu0 0.0
        %1571 = vmatpush2.msra.mxu0 0.0
        %1572 = vmatprep.subr.mxu0 0.0
        %1573 = vmatpush2.msra.mxu0 0.0
        %1574 = vmatprep.subr.mxu0 0.0
        %1575 = vmatpush2.msra.mxu0 0.0
        %1576 = vmatprep.subr.mxu0 0.0
        %1577 = vmatpush2.msra.mxu0 0.0
        %1578 = vmatprep.subr.mxu0 0.0
        %1579 = vmatpush2.msra.mxu0 0.0
        %1580 = vmatprep.subr.mxu0 0.0
        %1581 = vmatpush2.msra.mxu0 0.0
        %1582 = vmatprep.subr.mxu0 0.0
        %1583 = vmatpush2.msra.mxu0 0.0
        %1584 = vmatprep.subr.mxu0 0.0
        %1585 = vmatpush2.msra.mxu0 0.0
        %1586 = vmatprep.subr.mxu0 0.0
        %1587 = vmatpush2.msra.mxu0 0.0
        %1588 = vmatprep.subr.mxu0 0.0
        %1589 = vmatpush2.msra.mxu0 0.0
        %1590 = vmatprep.subr.mxu0 0.0
        %1591 = vmatpush2.msra.mxu0 0.0
        %1592 = vmatprep.subr.mxu0 0.0
        %1593 = vmatpush2.msra.mxu0 0.0
        %1594 = vmatprep.subr.mxu0 0.0
        %1595 = vmatpush2.msra.mxu0 0.0
        %1596 = vmatprep.subr.mxu0 0.0
        %1597 = vmatpush2.msra.mxu0 0.0
        %1598 = vmatprep.subr.mxu0 0.0
        %1599 = vmatpush2.msra.mxu0 0.0
        %1600 = vmatprep.subr.mxu0 0.0
        %1601 = vmatpush2.msra.mxu0 0.0
        %1602 = vmatprep.mubr.f32.mxu0 0.0
        %1603 = vmatmul.mubr.f32.gmra.mxu0 %v982
        %v1604 = vpop.f32.mrf.mxu0
        %v1605 = vadd.f32 0.0, %v1604
        %v1606 = vpop.f32.mrf.mxu0
        %1607 = vmatprep.mubr.f32.mxu0 0.0
        %1608 = vmatmul.mubr.f32.gmra.mxu0 %v985
        %v1609 = vpop.f32.mrf.mxu0
        %v1610 = vadd.f32 0.0, %v1609
        %v1611 = vpop.f32.mrf.mxu0
        %1612 = vdwg.mxu0
        %v1613 = vmul.f32 %v1605, %v1072
        %v1614 = vmul.f32 %v1610, %v1074
        %v1615 = vld [vmem:[%s9] sm:$0xff]
        %v1616 = vld [vmem:[%s9 + $0x8] sm:$0xff]
        %v1617 = vld [vmem:[%s9 + $0x10] sm:$0xff]
        %v1618 = vld [vmem:[%s9 + $0x18] sm:$0xff]
        %v1619 = vld [vmem:[%s10] sm:$0x1]
        %v1621 = vlaneseq
        %v1622 = vshrl.u32 %v1621, 7
        %v1623 = vsub.s32 0, %v1622
        %v1624 = vrot.slane %v1619, %v1623
        %v1627 = vsel %vm755, %v1073, 0
        %v1630 = vsel %vm755, %v1075, 0
        %v1633 = vsel %vm755, %v1151, 0
        %v1636 = vsel %vm755, %v1152, 0
        %v1639 = vsel %vm755, %v1228, 0
        %v1642 = vsel %vm755, %v1229, 0
        %v1645 = vsel %vm755, %v1305, 0
        %v1648 = vsel %vm755, %v1306, 0
        %v1651 = vsel %vm755, %v1382, 0
        %v1654 = vsel %vm755, %v1383, 0
        %v1657 = vsel %vm755, %v1459, 0
        %v1660 = vsel %vm755, %v1460, 0
        %v1663 = vsel %vm755, %v1536, 0
        %v1666 = vsel %vm755, %v1537, 0
        %v1669 = vsel %vm755, %v1613, 0
        %v1672 = vsel %vm755, %v1614, 0
        %1674 = vmatprep.subr.mxu0 0.0
        %1675 = vmatpush1.msra.mxu0 0.0
        %1676 = vmatprep.subr.mxu0 0.0
        %1677 = vmatpush1.msra.mxu0 0.0
        %1678 = vmatprep.subr.mxu0 0.0
        %1679 = vmatpush1.msra.mxu0 0.0
        %1680 = vmatprep.subr.mxu0 0.0
        %1681 = vmatpush1.msra.mxu0 0.0
        %1682 = vmatprep.subr.mxu0 0.0
        %1683 = vmatpush1.msra.mxu0 0.0
        %1684 = vmatprep.subr.mxu0 0.0
        %1685 = vmatpush1.msra.mxu0 0.0
        %1686 = vmatprep.subr.mxu0 0.0
        %1687 = vmatpush1.msra.mxu0 0.0
        %1688 = vmatprep.subr.mxu0 0.0
        %1689 = vmatpush1.msra.mxu0 0.0
        %1690 = vmatprep.subr.mxu0 0.0
        %1691 = vmatpush1.msra.mxu0 0.0
        %1692 = vmatprep.subr.mxu0 0.0
        %1693 = vmatpush1.msra.mxu0 0.0
        %1694 = vmatprep.subr.mxu0 0.0
        %1695 = vmatpush1.msra.mxu0 0.0
        %1696 = vmatprep.subr.mxu0 0.0
        %1697 = vmatpush1.msra.mxu0 0.0
        %1698 = vmatprep.subr.mxu0 0.0
        %1699 = vmatpush1.msra.mxu0 %v1618
        %1700 = vmatprep.subr.mxu0 0.0
        %1701 = vmatpush1.msra.mxu0 %v1617
        %1702 = vmatprep.subr.mxu0 0.0
        %1703 = vmatpush1.msra.mxu0 %v1616
        %1704 = vmatprep.subr.mxu0 0.0
        %1705 = vmatpush1.msra.mxu0 %v1615
        %1706 = vmatprep.subr.mxu0 0.0
        %1707 = vmatpush2.msra.mxu0 0.0
        %1708 = vmatprep.subr.mxu0 0.0
        %1709 = vmatpush2.msra.mxu0 0.0
        %1710 = vmatprep.subr.mxu0 0.0
        %1711 = vmatpush2.msra.mxu0 0.0
        %1712 = vmatprep.subr.mxu0 0.0
        %1713 = vmatpush2.msra.mxu0 0.0
        %1714 = vmatprep.subr.mxu0 0.0
        %1715 = vmatpush2.msra.mxu0 0.0
        %1716 = vmatprep.subr.mxu0 0.0
        %1717 = vmatpush2.msra.mxu0 0.0
        %1718 = vmatprep.subr.mxu0 0.0
        %1719 = vmatpush2.msra.mxu0 0.0
        %1720 = vmatprep.subr.mxu0 0.0
        %1721 = vmatpush2.msra.mxu0 0.0
        %1722 = vmatprep.subr.mxu0 0.0
        %1723 = vmatpush2.msra.mxu0 0.0
        %1724 = vmatprep.subr.mxu0 0.0
        %1725 = vmatpush2.msra.mxu0 0.0
        %1726 = vmatprep.subr.mxu0 0.0
        %1727 = vmatpush2.msra.mxu0 0.0
        %1728 = vmatprep.subr.mxu0 0.0
        %1729 = vmatpush2.msra.mxu0 0.0
        %1730 = vmatprep.subr.mxu0 0.0
        %1731 = vmatpush2.msra.mxu0 0.0
        %1732 = vmatprep.subr.mxu0 0.0
        %1733 = vmatpush2.msra.mxu0 0.0
        %1734 = vmatprep.subr.mxu0 0.0
        %1735 = vmatpush2.msra.mxu0 0.0
        %1736 = vmatprep.subr.mxu0 0.0
        %1737 = vmatpush2.msra.mxu0 0.0
        %1738 = vmatprep.mubr.f32.mxu0 0.0
        %1739 = vmatmul.mubr.f32.gmra.mxu0 %v1627
        %v1740 = vpop.f32.mrf.mxu0
        %v1741 = vadd.f32 %v1624, %v1740
        %v1742 = vpop.f32.mrf.mxu0
        %1743 = vmatprep.mubr.f32.mxu0 0.0
        %1744 = vmatmul.mubr.f32.gmra.mxu0 %v1630
        %v1745 = vpop.f32.mrf.mxu0
        %v1746 = vadd.f32 %v1624, %v1745
        %v1747 = vpop.f32.mrf.mxu0
        %1748 = vmatprep.mubr.f32.mxu0 0.0
        %1749 = vmatmul.mubr.f32.gmra.mxu0 %v1633
        %v1750 = vpop.f32.mrf.mxu0
        %v1751 = vadd.f32 %v1624, %v1750
        %v1752 = vpop.f32.mrf.mxu0
        %1753 = vmatprep.mubr.f32.mxu0 0.0
        %1754 = vmatmul.mubr.f32.gmra.mxu0 %v1636
        %v1755 = vpop.f32.mrf.mxu0
        %v1756 = vadd.f32 %v1624, %v1755
        %v1757 = vpop.f32.mrf.mxu0
        %1758 = vmatprep.mubr.f32.mxu0 0.0
        %1759 = vmatmul.mubr.f32.gmra.mxu0 %v1639
        %v1760 = vpop.f32.mrf.mxu0
        %v1761 = vadd.f32 %v1624, %v1760
        %v1762 = vpop.f32.mrf.mxu0
        %1763 = vmatprep.mubr.f32.mxu0 0.0
        %1764 = vmatmul.mubr.f32.gmra.mxu0 %v1642
        %v1765 = vpop.f32.mrf.mxu0
        %v1766 = vadd.f32 %v1624, %v1765
        %v1767 = vpop.f32.mrf.mxu0
        %1768 = vmatprep.mubr.f32.mxu0 0.0
        %1769 = vmatmul.mubr.f32.gmra.mxu0 %v1645
        %v1770 = vpop.f32.mrf.mxu0
        %v1771 = vadd.f32 %v1624, %v1770
        %v1772 = vpop.f32.mrf.mxu0
        %1773 = vmatprep.mubr.f32.mxu0 0.0
        %1774 = vmatmul.mubr.f32.gmra.mxu0 %v1648
        %v1775 = vpop.f32.mrf.mxu0
        %v1776 = vadd.f32 %v1624, %v1775
        %v1777 = vpop.f32.mrf.mxu0
        %1778 = vmatprep.mubr.f32.mxu0 0.0
        %1779 = vmatmul.mubr.f32.gmra.mxu0 %v1651
        %v1780 = vpop.f32.mrf.mxu0
        %v1781 = vadd.f32 %v1624, %v1780
        %v1782 = vpop.f32.mrf.mxu0
        %1783 = vmatprep.mubr.f32.mxu0 0.0
        %1784 = vmatmul.mubr.f32.gmra.mxu0 %v1654
        %v1785 = vpop.f32.mrf.mxu0
        %v1786 = vadd.f32 %v1624, %v1785
        %v1787 = vpop.f32.mrf.mxu0
        %1788 = vmatprep.mubr.f32.mxu0 0.0
        %1789 = vmatmul.mubr.f32.gmra.mxu0 %v1657
        %v1790 = vpop.f32.mrf.mxu0
        %v1791 = vadd.f32 %v1624, %v1790
        %v1792 = vpop.f32.mrf.mxu0
        %1793 = vmatprep.mubr.f32.mxu0 0.0
        %1794 = vmatmul.mubr.f32.gmra.mxu0 %v1660
        %v1795 = vpop.f32.mrf.mxu0
        %v1796 = vadd.f32 %v1624, %v1795
        %v1797 = vpop.f32.mrf.mxu0
        %1798 = vmatprep.mubr.f32.mxu0 0.0
        %1799 = vmatmul.mubr.f32.gmra.mxu0 %v1663
        %v1800 = vpop.f32.mrf.mxu0
        %v1801 = vadd.f32 %v1624, %v1800
        %v1802 = vpop.f32.mrf.mxu0
        %1803 = vmatprep.mubr.f32.mxu0 0.0
        %1804 = vmatmul.mubr.f32.gmra.mxu0 %v1666
        %v1805 = vpop.f32.mrf.mxu0
        %v1806 = vadd.f32 %v1624, %v1805
        %v1807 = vpop.f32.mrf.mxu0
        %1808 = vmatprep.mubr.f32.mxu0 0.0
        %1809 = vmatmul.mubr.f32.gmra.mxu0 %v1669
        %v1810 = vpop.f32.mrf.mxu0
        %v1811 = vadd.f32 %v1624, %v1810
        %v1812 = vpop.f32.mrf.mxu0
        %1813 = vmatprep.mubr.f32.mxu0 0.0
        %1814 = vmatmul.mubr.f32.gmra.mxu0 %v1672
        %v1815 = vpop.f32.mrf.mxu0
        %v1816 = vadd.f32 %v1624, %v1815
        %v1817 = vpop.f32.mrf.mxu0
        %1818 = vdwg.mxu0
        %v1819 = vmax.f32 %v1741, 0.0
        %v1820 = vmax.f32 %v1746, 0.0
        %v1821 = vmax.f32 %v1751, 0.0
        %v1822 = vmax.f32 %v1756, 0.0
        %v1823 = vmax.f32 %v1761, 0.0
        %v1824 = vmax.f32 %v1766, 0.0
        %v1825 = vmax.f32 %v1771, 0.0
        %v1826 = vmax.f32 %v1776, 0.0
        %v1827 = vmax.f32 %v1781, 0.0
        %v1828 = vmax.f32 %v1786, 0.0
        %v1829 = vmax.f32 %v1791, 0.0
        %v1830 = vmax.f32 %v1796, 0.0
        %v1831 = vmax.f32 %v1801, 0.0
        %v1832 = vmax.f32 %v1806, 0.0
        %v1833 = vmax.f32 %v1811, 0.0
        %v1834 = vmax.f32 %v1816, 0.0
        %v1835 = vld [vmem:[%s11] sm:$0xff]
        %v1836 = vld [vmem:[%s11 + $0x8] sm:$0xff]
        %v1837 = vld [vmem:[%s11 + $0x10] sm:$0xff]
        %v1838 = vld [vmem:[%s11 + $0x18] sm:$0xff]
        %v1839 = vld [vmem:[%s12] sm:$0x1]
        %v1841 = vlaneseq
        %v1842 = vshrl.u32 %v1841, 7
        %v1843 = vsub.s32 0, %v1842
        %v1844 = vrot.slane %v1839, %v1843
        %v1847 = vsel %vm755, %v1819, 0
        %v1850 = vsel %vm755, %v1820, 0
        %v1853 = vsel %vm755, %v1821, 0
        %v1856 = vsel %vm755, %v1822, 0
        %v1859 = vsel %vm755, %v1823, 0
        %v1862 = vsel %vm755, %v1824, 0
        %v1865 = vsel %vm755, %v1825, 0
        %v1868 = vsel %vm755, %v1826, 0
        %v1871 = vsel %vm755, %v1827, 0
        %v1874 = vsel %vm755, %v1828, 0
        %v1877 = vsel %vm755, %v1829, 0
        %v1880 = vsel %vm755, %v1830, 0
        %v1883 = vsel %vm755, %v1831, 0
        %v1886 = vsel %vm755, %v1832, 0
        %v1889 = vsel %vm755, %v1833, 0
        %v1892 = vsel %vm755, %v1834, 0
        %1894 = vmatprep.subr.mxu0 0.0
        %1895 = vmatpush1.msra.mxu0 0.0
        %1896 = vmatprep.subr.mxu0 0.0
        %1897 = vmatpush1.msra.mxu0 0.0
        %1898 = vmatprep.subr.mxu0 0.0
        %1899 = vmatpush1.msra.mxu0 0.0
        %1900 = vmatprep.subr.mxu0 0.0
        %1901 = vmatpush1.msra.mxu0 0.0
        %1902 = vmatprep.subr.mxu0 0.0
        %1903 = vmatpush1.msra.mxu0 0.0
        %1904 = vmatprep.subr.mxu0 0.0
        %1905 = vmatpush1.msra.mxu0 0.0
        %1906 = vmatprep.subr.mxu0 0.0
        %1907 = vmatpush1.msra.mxu0 0.0
        %1908 = vmatprep.subr.mxu0 0.0
        %1909 = vmatpush1.msra.mxu0 0.0
        %1910 = vmatprep.subr.mxu0 0.0
        %1911 = vmatpush1.msra.mxu0 0.0
        %1912 = vmatprep.subr.mxu0 0.0
        %1913 = vmatpush1.msra.mxu0 0.0
        %1914 = vmatprep.subr.mxu0 0.0
        %1915 = vmatpush1.msra.mxu0 0.0
        %1916 = vmatprep.subr.mxu0 0.0
        %1917 = vmatpush1.msra.mxu0 0.0
        %1918 = vmatprep.subr.mxu0 0.0
        %1919 = vmatpush1.msra.mxu0 %v1838
        %1920 = vmatprep.subr.mxu0 0.0
        %1921 = vmatpush1.msra.mxu0 %v1837
        %1922 = vmatprep.subr.mxu0 0.0
        %1923 = vmatpush1.msra.mxu0 %v1836
        %1924 = vmatprep.subr.mxu0 0.0
        %1925 = vmatpush1.msra.mxu0 %v1835
        %1926 = vmatprep.subr.mxu0 0.0
        %1927 = vmatpush2.msra.mxu0 0.0
        %1928 = vmatprep.subr.mxu0 0.0
        %1929 = vmatpush2.msra.mxu0 0.0
        %1930 = vmatprep.subr.mxu0 0.0
        %1931 = vmatpush2.msra.mxu0 0.0
        %1932 = vmatprep.subr.mxu0 0.0
        %1933 = vmatpush2.msra.mxu0 0.0
        %1934 = vmatprep.subr.mxu0 0.0
        %1935 = vmatpush2.msra.mxu0 0.0
        %1936 = vmatprep.subr.mxu0 0.0
        %1937 = vmatpush2.msra.mxu0 0.0
        %1938 = vmatprep.subr.mxu0 0.0
        %1939 = vmatpush2.msra.mxu0 0.0
        %1940 = vmatprep.subr.mxu0 0.0
        %1941 = vmatpush2.msra.mxu0 0.0
        %1942 = vmatprep.subr.mxu0 0.0
        %1943 = vmatpush2.msra.mxu0 0.0
        %1944 = vmatprep.subr.mxu0 0.0
        %1945 = vmatpush2.msra.mxu0 0.0
        %1946 = vmatprep.subr.mxu0 0.0
        %1947 = vmatpush2.msra.mxu0 0.0
        %1948 = vmatprep.subr.mxu0 0.0
        %1949 = vmatpush2.msra.mxu0 0.0
        %1950 = vmatprep.subr.mxu0 0.0
        %1951 = vmatpush2.msra.mxu0 0.0
        %1952 = vmatprep.subr.mxu0 0.0
        %1953 = vmatpush2.msra.mxu0 0.0
        %1954 = vmatprep.subr.mxu0 0.0
        %1955 = vmatpush2.msra.mxu0 0.0
        %1956 = vmatprep.subr.mxu0 0.0
        %1957 = vmatpush2.msra.mxu0 0.0
        %1958 = vmatprep.mubr.f32.mxu0 0.0
        %1959 = vmatmul.mubr.f32.gmra.mxu0 %v1847
        %v1960 = vpop.f32.mrf.mxu0
        %v1961 = vadd.f32 %v1844, %v1960
        %v1962 = vpop.f32.mrf.mxu0
        %1963 = vmatprep.mubr.f32.mxu0 0.0
        %1964 = vmatmul.mubr.f32.gmra.mxu0 %v1850
        %v1965 = vpop.f32.mrf.mxu0
        %v1966 = vadd.f32 %v1844, %v1965
        %v1967 = vpop.f32.mrf.mxu0
        %1968 = vmatprep.mubr.f32.mxu0 0.0
        %1969 = vmatmul.mubr.f32.gmra.mxu0 %v1853
        %v1970 = vpop.f32.mrf.mxu0
        %v1971 = vadd.f32 %v1844, %v1970
        %v1972 = vpop.f32.mrf.mxu0
        %1973 = vmatprep.mubr.f32.mxu0 0.0
        %1974 = vmatmul.mubr.f32.gmra.mxu0 %v1856
        %v1975 = vpop.f32.mrf.mxu0
        %v1976 = vadd.f32 %v1844, %v1975
        %v1977 = vpop.f32.mrf.mxu0
        %1978 = vmatprep.mubr.f32.mxu0 0.0
        %1979 = vmatmul.mubr.f32.gmra.mxu0 %v1859
        %v1980 = vpop.f32.mrf.mxu0
        %v1981 = vadd.f32 %v1844, %v1980
        %v1982 = vpop.f32.mrf.mxu0
        %1983 = vmatprep.mubr.f32.mxu0 0.0
        %1984 = vmatmul.mubr.f32.gmra.mxu0 %v1862
        %v1985 = vpop.f32.mrf.mxu0
        %v1986 = vadd.f32 %v1844, %v1985
        %v1987 = vpop.f32.mrf.mxu0
        %1988 = vmatprep.mubr.f32.mxu0 0.0
        %1989 = vmatmul.mubr.f32.gmra.mxu0 %v1865
        %v1990 = vpop.f32.mrf.mxu0
        %v1991 = vadd.f32 %v1844, %v1990
        %v1992 = vpop.f32.mrf.mxu0
        %1993 = vmatprep.mubr.f32.mxu0 0.0
        %1994 = vmatmul.mubr.f32.gmra.mxu0 %v1868
        %v1995 = vpop.f32.mrf.mxu0
        %v1996 = vadd.f32 %v1844, %v1995
        %v1997 = vpop.f32.mrf.mxu0
        %1998 = vmatprep.mubr.f32.mxu0 0.0
        %1999 = vmatmul.mubr.f32.gmra.mxu0 %v1871
        %v2000 = vpop.f32.mrf.mxu0
        %v2001 = vadd.f32 %v1844, %v2000
        %v2002 = vpop.f32.mrf.mxu0
        %2003 = vmatprep.mubr.f32.mxu0 0.0
        %2004 = vmatmul.mubr.f32.gmra.mxu0 %v1874
        %v2005 = vpop.f32.mrf.mxu0
        %v2006 = vadd.f32 %v1844, %v2005
        %v2007 = vpop.f32.mrf.mxu0
        %2008 = vmatprep.mubr.f32.mxu0 0.0
        %2009 = vmatmul.mubr.f32.gmra.mxu0 %v1877
        %v2010 = vpop.f32.mrf.mxu0
        %v2011 = vadd.f32 %v1844, %v2010
        %v2012 = vpop.f32.mrf.mxu0
        %2013 = vmatprep.mubr.f32.mxu0 0.0
        %2014 = vmatmul.mubr.f32.gmra.mxu0 %v1880
        %v2015 = vpop.f32.mrf.mxu0
        %v2016 = vadd.f32 %v1844, %v2015
        %v2017 = vpop.f32.mrf.mxu0
        %2018 = vmatprep.mubr.f32.mxu0 0.0
        %2019 = vmatmul.mubr.f32.gmra.mxu0 %v1883
        %v2020 = vpop.f32.mrf.mxu0
        %v2021 = vadd.f32 %v1844, %v2020
        %v2022 = vpop.f32.mrf.mxu0
        %2023 = vmatprep.mubr.f32.mxu0 0.0
        %2024 = vmatmul.mubr.f32.gmra.mxu0 %v1886
        %v2025 = vpop.f32.mrf.mxu0
        %v2026 = vadd.f32 %v1844, %v2025
        %v2027 = vpop.f32.mrf.mxu0
        %2028 = vmatprep.mubr.f32.mxu0 0.0
        %2029 = vmatmul.mubr.f32.gmra.mxu0 %v1889
        %v2030 = vpop.f32.mrf.mxu0
        %v2031 = vadd.f32 %v1844, %v2030
        %v2032 = vpop.f32.mrf.mxu0
        %2033 = vmatprep.mubr.f32.mxu0 0.0
        %2034 = vmatmul.mubr.f32.gmra.mxu0 %v1892
        %v2035 = vpop.f32.mrf.mxu0
        %v2036 = vadd.f32 %v1844, %v2035
        %v2037 = vpop.f32.mrf.mxu0
        %2038 = vdwg.mxu0
        %v2039 = vadd.f32 %v1961, %v1819
        %v2040 = vadd.f32 %v1966, %v1820
        %v2041 = vadd.f32 %v1971, %v1821
        %v2042 = vadd.f32 %v1976, %v1822
        %v2043 = vadd.f32 %v1981, %v1823
        %v2044 = vadd.f32 %v1986, %v1824
        %v2045 = vadd.f32 %v1991, %v1825
        %v2046 = vadd.f32 %v1996, %v1826
        %v2047 = vadd.f32 %v2001, %v1827
        %v2048 = vadd.f32 %v2006, %v1828
        %v2049 = vadd.f32 %v2011, %v1829
        %v2050 = vadd.f32 %v2016, %v1830
        %v2051 = vadd.f32 %v2021, %v1831
        %v2052 = vadd.f32 %v2026, %v1832
        %v2053 = vadd.f32 %v2031, %v1833
        %v2054 = vadd.f32 %v2036, %v1834
        %v2055 = vtanh.pop %v2039
        %v2056 = vtanh.pop %v2040
        %v2057 = vtanh.pop %v2041
        %v2058 = vtanh.pop %v2042
        %v2059 = vtanh.pop %v2043
        %v2060 = vtanh.pop %v2044
        %v2061 = vtanh.pop %v2045
        %v2062 = vtanh.pop %v2046
        %v2063 = vtanh.pop %v2047
        %v2064 = vtanh.pop %v2048
        %v2065 = vtanh.pop %v2049
        %v2066 = vtanh.pop %v2050
        %v2067 = vtanh.pop %v2051
        %v2068 = vtanh.pop %v2052
        %v2069 = vtanh.pop %v2053
        %v2070 = vtanh.pop %v2054
        %v2071 = vmax.f32 %v2055, 0.0
        %v2072 = vmax.f32 %v2056, 0.0
        %v2073 = vmax.f32 %v2057, 0.0
        %v2074 = vmax.f32 %v2058, 0.0
        %v2075 = vmax.f32 %v2059, 0.0
        %v2076 = vmax.f32 %v2060, 0.0
        %v2077 = vmax.f32 %v2061, 0.0
        %v2078 = vmax.f32 %v2062, 0.0
        %v2079 = vmax.f32 %v2063, 0.0
        %v2080 = vmax.f32 %v2064, 0.0
        %v2081 = vmax.f32 %v2065, 0.0
        %v2082 = vmax.f32 %v2066, 0.0
        %v2083 = vmax.f32 %v2067, 0.0
        %v2084 = vmax.f32 %v2068, 0.0
        %v2085 = vmax.f32 %v2069, 0.0
        %v2086 = vmax.f32 %v2070, 0.0
        %v2087 = vld [vmem:[%s13] sm:$0xff]
        %v2088 = vld [vmem:[%s13 + $0x8] sm:$0xff]
        %v2089 = vld [vmem:[%s13 + $0x10] sm:$0xff]
        %v2090 = vld [vmem:[%s13 + $0x18] sm:$0xff]
        %v2091 = vld [vmem:[#allocation2] sm:$0x1]
        %v2093 = vlaneseq
        %v2094 = vshrl.u32 %v2093, 7
        %v2095 = vsub.s32 0, %v2094
        %v2096 = vrot.slane %v2091, %v2095
        %v2099 = vsel %vm755, %v2071, 0
        %v2102 = vsel %vm755, %v2072, 0
        %v2105 = vsel %vm755, %v2073, 0
        %v2108 = vsel %vm755, %v2074, 0
        %v2111 = vsel %vm755, %v2075, 0
        %v2114 = vsel %vm755, %v2076, 0
        %v2117 = vsel %vm755, %v2077, 0
        %v2120 = vsel %vm755, %v2078, 0
        %v2123 = vsel %vm755, %v2079, 0
        %v2126 = vsel %vm755, %v2080, 0
        %v2129 = vsel %vm755, %v2081, 0
        %v2132 = vsel %vm755, %v2082, 0
        %v2135 = vsel %vm755, %v2083, 0
        %v2138 = vsel %vm755, %v2084, 0
        %v2141 = vsel %vm755, %v2085, 0
        %v2144 = vsel %vm755, %v2086, 0
        %2146 = vmatprep.subr.mxu0 0.0
        %2147 = vmatpush1.msra.mxu0 0.0
        %2148 = vmatprep.subr.mxu0 0.0
        %2149 = vmatpush1.msra.mxu0 0.0
        %2150 = vmatprep.subr.mxu0 0.0
        %2151 = vmatpush1.msra.mxu0 0.0
        %2152 = vmatprep.subr.mxu0 0.0
        %2153 = vmatpush1.msra.mxu0 0.0
        %2154 = vmatprep.subr.mxu0 0.0
        %2155 = vmatpush1.msra.mxu0 0.0
        %2156 = vmatprep.subr.mxu0 0.0
        %2157 = vmatpush1.msra.mxu0 0.0
        %2158 = vmatprep.subr.mxu0 0.0
        %2159 = vmatpush1.msra.mxu0 0.0
        %2160 = vmatprep.subr.mxu0 0.0
        %2161 = vmatpush1.msra.mxu0 0.0
        %2162 = vmatprep.subr.mxu0 0.0
        %2163 = vmatpush1.msra.mxu0 0.0
        %2164 = vmatprep.subr.mxu0 0.0
        %2165 = vmatpush1.msra.mxu0 0.0
        %2166 = vmatprep.subr.mxu0 0.0
        %2167 = vmatpush1.msra.mxu0 0.0
        %2168 = vmatprep.subr.mxu0 0.0
        %2169 = vmatpush1.msra.mxu0 0.0
        %2170 = vmatprep.subr.mxu0 0.0
        %2171 = vmatpush1.msra.mxu0 %v2090
        %2172 = vmatprep.subr.mxu0 0.0
        %2173 = vmatpush1.msra.mxu0 %v2089
        %2174 = vmatprep.subr.mxu0 0.0
        %2175 = vmatpush1.msra.mxu0 %v2088
        %2176 = vmatprep.subr.mxu0 0.0
        %2177 = vmatpush1.msra.mxu0 %v2087
        %2178 = vmatprep.subr.mxu0 0.0
        %2179 = vmatpush2.msra.mxu0 0.0
        %2180 = vmatprep.subr.mxu0 0.0
        %2181 = vmatpush2.msra.mxu0 0.0
        %2182 = vmatprep.subr.mxu0 0.0
        %2183 = vmatpush2.msra.mxu0 0.0
        %2184 = vmatprep.subr.mxu0 0.0
        %2185 = vmatpush2.msra.mxu0 0.0
        %2186 = vmatprep.subr.mxu0 0.0
        %2187 = vmatpush2.msra.mxu0 0.0
        %2188 = vmatprep.subr.mxu0 0.0
        %2189 = vmatpush2.msra.mxu0 0.0
        %2190 = vmatprep.subr.mxu0 0.0
        %2191 = vmatpush2.msra.mxu0 0.0
        %2192 = vmatprep.subr.mxu0 0.0
        %2193 = vmatpush2.msra.mxu0 0.0
        %2194 = vmatprep.subr.mxu0 0.0
        %2195 = vmatpush2.msra.mxu0 0.0
        %2196 = vmatprep.subr.mxu0 0.0
        %2197 = vmatpush2.msra.mxu0 0.0
        %2198 = vmatprep.subr.mxu0 0.0
        %2199 = vmatpush2.msra.mxu0 0.0
        %2200 = vmatprep.subr.mxu0 0.0
        %2201 = vmatpush2.msra.mxu0 0.0
        %2202 = vmatprep.subr.mxu0 0.0
        %2203 = vmatpush2.msra.mxu0 0.0
        %2204 = vmatprep.subr.mxu0 0.0
        %2205 = vmatpush2.msra.mxu0 0.0
        %2206 = vmatprep.subr.mxu0 0.0
        %2207 = vmatpush2.msra.mxu0 0.0
        %2208 = vmatprep.subr.mxu0 0.0
        %2209 = vmatpush2.msra.mxu0 0.0
        %2210 = vmatprep.mubr.f32.mxu0 0.0
        %2211 = vmatmul.mubr.f32.gmra.mxu0 %v2099
        %v2212 = vpop.f32.mrf.mxu0
        %v2213 = vadd.f32 %v2096, %v2212
        %v2214 = vpop.f32.mrf.mxu0
        %2215 = vmatprep.mubr.f32.mxu0 0.0
        %2216 = vmatmul.mubr.f32.gmra.mxu0 %v2102
        %v2217 = vpop.f32.mrf.mxu0
        %v2218 = vadd.f32 %v2096, %v2217
        %v2219 = vpop.f32.mrf.mxu0
        %2220 = vmatprep.mubr.f32.mxu0 0.0
        %2221 = vmatmul.mubr.f32.gmra.mxu0 %v2105
        %v2222 = vpop.f32.mrf.mxu0
        %v2223 = vadd.f32 %v2096, %v2222
        %v2224 = vpop.f32.mrf.mxu0
        %2225 = vmatprep.mubr.f32.mxu0 0.0
        %2226 = vmatmul.mubr.f32.gmra.mxu0 %v2108
        %v2227 = vpop.f32.mrf.mxu0
        %v2228 = vadd.f32 %v2096, %v2227
        %v2229 = vpop.f32.mrf.mxu0
        %2230 = vmatprep.mubr.f32.mxu0 0.0
        %2231 = vmatmul.mubr.f32.gmra.mxu0 %v2111
        %v2232 = vpop.f32.mrf.mxu0
        %v2233 = vadd.f32 %v2096, %v2232
        %v2234 = vpop.f32.mrf.mxu0
        %2235 = vmatprep.mubr.f32.mxu0 0.0
        %2236 = vmatmul.mubr.f32.gmra.mxu0 %v2114
        %v2237 = vpop.f32.mrf.mxu0
        %v2238 = vadd.f32 %v2096, %v2237
        %v2239 = vpop.f32.mrf.mxu0
        %2240 = vmatprep.mubr.f32.mxu0 0.0
        %2241 = vmatmul.mubr.f32.gmra.mxu0 %v2117
        %v2242 = vpop.f32.mrf.mxu0
        %v2243 = vadd.f32 %v2096, %v2242
        %v2244 = vpop.f32.mrf.mxu0
        %2245 = vmatprep.mubr.f32.mxu0 0.0
        %2246 = vmatmul.mubr.f32.gmra.mxu0 %v2120
        %v2247 = vpop.f32.mrf.mxu0
        %v2248 = vadd.f32 %v2096, %v2247
        %v2249 = vpop.f32.mrf.mxu0
        %2250 = vmatprep.mubr.f32.mxu0 0.0
        %2251 = vmatmul.mubr.f32.gmra.mxu0 %v2123
        %v2252 = vpop.f32.mrf.mxu0
        %v2253 = vadd.f32 %v2096, %v2252
        %v2254 = vpop.f32.mrf.mxu0
        %2255 = vmatprep.mubr.f32.mxu0 0.0
        %2256 = vmatmul.mubr.f32.gmra.mxu0 %v2126
        %v2257 = vpop.f32.mrf.mxu0
        %v2258 = vadd.f32 %v2096, %v2257
        %v2259 = vpop.f32.mrf.mxu0
        %2260 = vmatprep.mubr.f32.mxu0 0.0
        %2261 = vmatmul.mubr.f32.gmra.mxu0 %v2129
        %v2262 = vpop.f32.mrf.mxu0
        %v2263 = vadd.f32 %v2096, %v2262
        %v2264 = vpop.f32.mrf.mxu0
        %2265 = vmatprep.mubr.f32.mxu0 0.0
        %2266 = vmatmul.mubr.f32.gmra.mxu0 %v2132
        %v2267 = vpop.f32.mrf.mxu0
        %v2268 = vadd.f32 %v2096, %v2267
        %v2269 = vpop.f32.mrf.mxu0
        %2270 = vmatprep.mubr.f32.mxu0 0.0
        %2271 = vmatmul.mubr.f32.gmra.mxu0 %v2135
        %v2272 = vpop.f32.mrf.mxu0
        %v2273 = vadd.f32 %v2096, %v2272
        %v2274 = vpop.f32.mrf.mxu0
        %2275 = vmatprep.mubr.f32.mxu0 0.0
        %2276 = vmatmul.mubr.f32.gmra.mxu0 %v2138
        %v2277 = vpop.f32.mrf.mxu0
        %v2278 = vadd.f32 %v2096, %v2277
        %v2279 = vpop.f32.mrf.mxu0
        %2280 = vmatprep.mubr.f32.mxu0 0.0
        %2281 = vmatmul.mubr.f32.gmra.mxu0 %v2141
        %v2282 = vpop.f32.mrf.mxu0
        %v2283 = vadd.f32 %v2096, %v2282
        %v2284 = vpop.f32.mrf.mxu0
        %2285 = vmatprep.mubr.f32.mxu0 0.0
        %2286 = vmatmul.mubr.f32.gmra.mxu0 %v2144
        %v2287 = vpop.f32.mrf.mxu0
        %v2288 = vadd.f32 %v2096, %v2287
        %v2289 = vpop.f32.mrf.mxu0
        %2290 = vdwg.mxu0
        %2293 = vrot.lane.b32.xlu0 %v2223, 1
        %v2294 = vpop.permute.xlu0 %2293
        %2295 = vrot.lane.b32.xlu0 %v2228, 1
        %v2296 = vpop.permute.xlu0 %2295
        %2301 = vrot.lane.b32.xlu0 %v2233, 2
        %v2302 = vpop.permute.xlu0 %2301
        %2303 = vrot.lane.b32.xlu0 %v2238, 2
        %v2304 = vpop.permute.xlu0 %2303
        %2309 = vrot.lane.b32.xlu0 %v2243, 3
        %v2310 = vpop.permute.xlu0 %2309
        %2311 = vrot.lane.b32.xlu0 %v2248, 3
        %v2312 = vpop.permute.xlu0 %2311
        %2317 = vrot.lane.b32.xlu0 %v2253, 4
        %v2318 = vpop.permute.xlu0 %2317
        %2319 = vrot.lane.b32.xlu0 %v2258, 4
        %v2320 = vpop.permute.xlu0 %2319
        %2325 = vrot.lane.b32.xlu0 %v2263, 5
        %v2326 = vpop.permute.xlu0 %2325
        %2327 = vrot.lane.b32.xlu0 %v2268, 5
        %v2328 = vpop.permute.xlu0 %2327
        %2333 = vrot.lane.b32.xlu0 %v2273, 6
        %v2334 = vpop.permute.xlu0 %2333
        %2335 = vrot.lane.b32.xlu0 %v2278, 6
        %v2336 = vpop.permute.xlu0 %2335
        %2341 = vrot.lane.b32.xlu0 %v2283, 7
        %v2342 = vpop.permute.xlu0 %2341
        %2343 = vrot.lane.b32.xlu0 %v2288, 7
        %v2344 = vpop.permute.xlu0 %2343
        %vm2347 = vcmask 7168
        %v2348 = vsel %vm2347, %v2213, %v2294
        %v2349 = vsel %vm2347, %v2218, %v2296
        %vm2350 = vcmask 15360
        %v2351 = vsel %vm2350, %v2348, %v2302
        %v2352 = vsel %vm2350, %v2349, %v2304
        %vm2353 = vcmask 23552
        %v2354 = vsel %vm2353, %v2351, %v2310
        %v2355 = vsel %vm2353, %v2352, %v2312
        %vm2356 = vcmask 31744
        %v2357 = vsel %vm2356, %v2354, %v2318
        %v2358 = vsel %vm2356, %v2355, %v2320
        %vm2359 = vcmask 39936
        %v2360 = vsel %vm2359, %v2357, %v2326
        %v2361 = vsel %vm2359, %v2358, %v2328
        %vm2362 = vcmask 48128
        %v2363 = vsel %vm2362, %v2360, %v2334
        %v2364 = vsel %vm2362, %v2361, %v2336
        %vm2365 = vcmask 56320
        %v2366 = vsel %vm2365, %v2363, %v2342
        %v2367 = vsel %vm2365, %v2364, %v2344
        %vm2368 = vcmask 64512
        %2369 = vst.msk [vmem:[%s511] sm:$0xff] %vm2368, %v2366
        %2370 = vst.msk [vmem:[%s511 + $0x8] sm:$0xff] %vm2368, %v2367
        %p2371 = scmp.lt.s32.totalorder %s29, 1
        %s2372 = scalar_select %p2371, %s29, 1
        %s2373 = smul.addr %s2372, 2
        %s2374 = smul.addr %s2373, 8
        %s2375 = scalar_lea.vmem %s15, %s2374
        // Predicated region
        $region85: #{tpu_custom_call.1} parent=79 // pred_check
          %p2376 = pneg %p367
        $region86: #{tpu_custom_call.1} parent=79 // pred_check_branch
          %2378 = sbr.rel (%p2376) target = $region88
        $region87: #{tpu_custom_call.1} parent=79 // pred_region
          _
        $region88: #{tpu_custom_call.1} parent=79 // pred_fallthru
          _
      $region80: #{tpu_custom_call.1} parent=5 // pred_fallthru
        _
      %p2379 = scmp.le.s32.totalorder 2, %s24
      // Predicated region
      $region89: #{tpu_custom_call.1} parent=5 // pred_check
        %p2380 = pneg %p2379
      $region90: #{tpu_custom_call.1} parent=5 // pred_check_branch
        %2382 = sbr.rel (%p2380) target = $region92
      $region91: #{tpu_custom_call.1} parent=5 // pred_region
        %s2383 = ssub.s32 %s24, 2
        // Predicated region
        $region93: #{tpu_custom_call.1} parent=91 // pred_check
          %p2384 = pneg %p373
        $region94: #{tpu_custom_call.1} parent=91 // pred_check_branch
          %2386 = sbr.rel (%p2384) target = $region96
        $region95: #{tpu_custom_call.1} parent=91 // pred_region
          %p2387 = scmp.lt.s32.totalorder %s30, 1
          %s2388 = scalar_select %p2387, %s30, 1
          %s2389 = smul.addr %s2388, 2
          %s2390 = smul.addr %s2389, 8
          %s2391 = scalar_lea.vmem %s15, %s2390
        $region96: #{tpu_custom_call.1} parent=91 // pred_fallthru
          _
      $region92: #{tpu_custom_call.1} parent=5 // pred_fallthru
        _
    $region6: #{tpu_custom_call.1} parent=1 // loop_footer
      %s28 = sadd.s32 1, %s24
    $region7: #{tpu_custom_call.1} parent=1 // loop_footer_branch
      %23 = sbr.rel target = $region3
    $region8: #{tpu_custom_call.1} parent=1 // loop_exit
      _
    %2392 = vsyncpa [#allocation4], 1
    %s2393 = scalar_lea.sflag [#allocation4], 1
    %2394 = vsyncpa %s2393, 1

</llo_original>
